<compile_context>
chip_gen: v7x
topology: tpu7x:2x2x1
jax: 0.10.0
libtpu: 0.0.40
codegen_flags: <defaults>
</compile_context>

<pallas_src>
import functools

import jax
import jax.numpy as jnp
from jax.experimental import pallas as pl
from jax.experimental.pallas import tpu as pltpu


# ---------------------------------------------------------------------------
# Helpers
# ---------------------------------------------------------------------------

def _pick_tile(dim, cap):
    """Largest 128-multiple tile <= cap dividing dim (or the full dim)."""
    if dim <= cap:
        return dim
    for t in range(cap, 127, -128):
        if dim % t == 0:
            return t
    return dim


def _vmem_limit(est_bytes):
    """Generous scoped-VMEM request: 2x estimate, >=8 MiB, capped for v7x."""
    return int(min(max(2 * est_bytes, 8 * 2**20), 48 * 2**20))


def _resident_spec(shape):
    nd = len(shape)
    return pl.BlockSpec(shape, lambda i, _nd=nd: (0,) * _nd)


# ---------------------------------------------------------------------------
# Tiled dense layer: y = x @ w + b (+ReLU), weight-streaming over (Dout, K)
# ---------------------------------------------------------------------------

def _matmul_bias_kernel(x_ref, w_ref, b_ref, o_ref, acc_ref, *, relu):
    k = pl.program_id(1)

    @pl.when(k == 0)
    def _():
        acc_ref[...] = jnp.zeros_like(acc_ref)

    # x is fully resident in VMEM; pick the k-th K tile via a leading-dim index.
    acc_ref[...] += jnp.dot(x_ref[k], w_ref[...],
                            preferred_element_type=jnp.float32)

    @pl.when(k == pl.num_programs(1) - 1)
    def _():
        y = acc_ref[...] + b_ref[...]
        if relu:
            y = jnp.maximum(y, 0.0)
        o_ref[...] = y.astype(o_ref.dtype)


def matmul_bias(x, w, b, *, relu=False, out_dtype=jnp.float32,
                tn_cap=2048, tk_cap=2048):
    """Fused dense layer.  Large bf16 weight tiles (up to 2048x2048) stream
    through VMEM; the tiny activation stays fully resident."""
    M, K = x.shape
    K2, N = w.shape
    assert K == K2 and b.shape == (1, N)
    x = x.astype(jnp.bfloat16)

    Mp = max(16, ((M + 15) // 16) * 16)       # full bf16 sublane packing
    if Mp != M:
        x = jnp.pad(x, ((0, Mp - M), (0, 0)))

    tn = _pick_tile(N, tn_cap)
    tk = _pick_tile(K, tk_cap)
    kt = K // tk
    # Reshape so the whole activation is one resident VMEM block and the
    # kernel selects the K tile with a cheap leading-dim dynamic index.
    x3 = x.reshape(Mp, kt, tk).transpose(1, 0, 2)          # (kt, Mp, tk)

    est = (2 * tk * tn * 2            # double-buffered bf16 weight tile
           + 2 * kt * Mp * tk * 2     # resident activation (allow 2 copies)
           + 2 * tn * 4               # bias tile
           + 3 * Mp * tn * 4)         # output block + f32 accumulator

    out = pl.pallas_call(
        functools.partial(_matmul_bias_kernel, relu=relu),
        out_shape=jax.ShapeDtypeStruct((Mp, N), out_dtype),
        grid_spec=pltpu.PrefetchScalarGridSpec(
            num_scalar_prefetch=0,
            grid=(N // tn, kt),
            in_specs=[
                pl.BlockSpec((kt, Mp, tk), lambda j, k: (0, 0, 0)),  # resident
                pl.BlockSpec((tk, tn), lambda j, k: (k, j)),
                pl.BlockSpec((1, tn), lambda j, k: (0, j)),
            ],
            out_specs=pl.BlockSpec((Mp, tn), lambda j, k: (0, j)),
            scratch_shapes=[pltpu.VMEM((Mp, tn), jnp.float32)],
        ),
        compiler_params=pltpu.CompilerParams(
            dimension_semantics=("parallel", "arbitrary"),
            vmem_limit_bytes=_vmem_limit(est)),
    )(x3, w, b)
    return out[:M] if Mp != M else out


# ---------------------------------------------------------------------------
# Fused RGCN layer: H' = act(H W_self + sum_r (A_r H) W_r + b), one kernel
# ---------------------------------------------------------------------------

def _rgcn_layer_kernel(adj_ref, h_ref, w_ref, b_ref, o_ref, acc_ref, *, relu):
    r = pl.program_id(1)
    dk = pl.program_id(2)

    @pl.when(jnp.logical_and(r == 0, dk == 0))
    def _():
        acc_ref[...] = jnp.zeros_like(acc_ref)

    # Message for the current relation / Din tile (A_0 = I covers the self term).
    msg = jnp.dot(adj_ref[...], h_ref[...], preferred_element_type=jnp.float32)
    acc_ref[...] += jnp.dot(msg.astype(jnp.bfloat16), w_ref[...],
                            preferred_element_type=jnp.float32)

    @pl.when(jnp.logical_and(r == pl.num_programs(1) - 1,
                             dk == pl.num_programs(2) - 1))
    def _():
        y = acc_ref[...] + b_ref[...]
        if relu:
            y = jnp.maximum(y, 0.0)
        o_ref[...] = y.astype(o_ref.dtype)


def rgcn_layer(h, adj_full, w3, b, *, relu, out_dtype=jnp.float32,
               tn_cap=2048, tk_cap=2048):
    """h: (Np, Din) f32; adj_full: (R+1, Np, Np) f32 (slot 0 = identity);
    w3: (R+1, Din, Dout) bf16; b: (1, Dout) f32."""
    Np, Din = h.shape
    R1, Din2, Dout = w3.shape
    assert Din == Din2 and adj_full.shape == (R1, Np, Np)

    tn = _pick_tile(Dout, tn_cap)
    tk = _pick_tile(Din, tk_cap)

    est = (2 * tk * tn * 2            # double-buffered bf16 weight tile
           + 2 * Np * tk * 4          # h tile (f32)
           + 2 * R1 * Np * Np * 4     # adjacency slices
           + 2 * tn * 4               # bias tile
           + 3 * Np * tn * 4)         # output block + f32 accumulator

    return pl.pallas_call(
        functools.partial(_rgcn_layer_kernel, relu=relu),
        out_shape=jax.ShapeDtypeStruct((Np, Dout), out_dtype),
        grid_spec=pltpu.PrefetchScalarGridSpec(
            num_scalar_prefetch=0,
            grid=(Dout // tn, R1, Din // tk),
            in_specs=[
                pl.BlockSpec((None, Np, Np), lambda j, r, dk: (r, 0, 0)),
                pl.BlockSpec((Np, tk), lambda j, r, dk: (0, dk)),
                pl.BlockSpec((None, tk, tn), lambda j, r, dk: (r, dk, j)),
                pl.BlockSpec((1, tn), lambda j, r, dk: (0, j)),
            ],
            out_specs=pl.BlockSpec((Np, tn), lambda j, r, dk: (0, j)),
            scratch_shapes=[pltpu.VMEM((Np, tn), jnp.float32)],
        ),
        compiler_params=pltpu.CompilerParams(
            dimension_semantics=("parallel", "arbitrary", "arbitrary"),
            vmem_limit_bytes=_vmem_limit(est)),
    )(adj_full, h, w3, b)


# ---------------------------------------------------------------------------
# VAE: enc (tiled) -> fused [mu|logvar, reparam, dec1] -> dec2 (tiled)
# ---------------------------------------------------------------------------

def _vae_mid_kernel(h_ref, wml_ref, bml_ref, wd1_ref, bd1_ref, eps_ref,
                    z_ref, d_ref, *, z_dim):
    h = h_ref[...]
    # mu and logvar packed into a single matmul (wml = [wm | wl]).
    ml = jnp.dot(h, wml_ref[...], preferred_element_type=jnp.float32) + bml_ref[...]
    mu = ml[:, :z_dim]
    logvar = ml[:, z_dim:]
    z = mu + jnp.exp(0.5 * logvar) * eps_ref[...]
    z_ref[...] = z.astype(z_ref.dtype)
    d = jnp.maximum(
        jnp.dot(z.astype(jnp.bfloat16), wd1_ref[...],
                preferred_element_type=jnp.float32) + bd1_ref[...], 0.0)
    d_ref[...] = d.astype(d_ref.dtype)


def vae_forward(params, x, key):
    p = params["vae"]
    din = x.shape[1]
    h_dim = p["enc"][0].shape[1]
    z_dim = p["dec1"][0].shape[0]
    eps = jax.random.normal(key, (1, z_dim), jnp.float32)

    # Large encoder weight -> tiled weight-streaming matmul (+ReLU fused).
    h = matmul_bias(x, p["enc"][0], p["enc"][1], relu=True,
                    out_dtype=jnp.bfloat16)

    # Small resident middle: packed mu|logvar, reparameterize, dec1 (+ReLU).
    args = [h, p["ml"][0], p["ml"][1], p["dec1"][0], p["dec1"][1], eps]
    z, d = pl.pallas_call(
        functools.partial(_vae_mid_kernel, z_dim=z_dim),
        out_shape=(jax.ShapeDtypeStruct((1, z_dim), jnp.float32),
                   jax.ShapeDtypeStruct((1, h_dim), jnp.bfloat16)),
        grid=(1,),
        in_specs=[_resident_spec(a.shape) for a in args],
        out_specs=(_resident_spec((1, z_dim)), _resident_spec((1, h_dim))),
    )(*args)

    # Large decoder weight -> tiled weight-streaming matmul.
    recon = matmul_bias(d, p["dec2"][0], p["dec2"][1], relu=False,
                        out_dtype=jnp.float32)
    return z, recon


# ---------------------------------------------------------------------------
# Parameter construction (deterministic, synthetic — no checkpoint loading)
# ---------------------------------------------------------------------------

def _init_linear(key, din, dout):
    kw, kb = jax.random.split(key)
    scale = 1.0 / jnp.sqrt(jnp.float32(din))
    w = jax.random.uniform(kw, (din, dout), jnp.float32, -scale, scale)
    b = jax.random.uniform(kb, (dout,), jnp.float32, -scale, scale)
    return w.astype(jnp.bfloat16), b.reshape(1, dout).astype(jnp.float32)


def init_agent_params(key, *, num_relations, in_ch, hid_ch, out_ch, n_layers,
                      vae_input_dim, vae_h_dim, vae_z_dim):
    keys = jax.random.split(key, 3 * n_layers + 6)
    ki = iter(range(len(keys)))

    rgcn = []
    dims = [in_ch] + [hid_ch] * (n_layers - 1) + [out_ch]
    for layer in range(n_layers):
        din, dout = dims[layer], dims[layer + 1]
        scale = 1.0 / jnp.sqrt(jnp.float32(din))
        w_rel = jax.random.uniform(keys[next(ki)], (num_relations, din, dout),
                                   jnp.float32, -scale, scale)
        w_self = jax.random.uniform(keys[next(ki)], (din, dout),
                                    jnp.float32, -scale, scale)
        b = jax.random.uniform(keys[next(ki)], (dout,), jnp.float32,
                               -scale, scale)
        # [W_self; W_1; ...; W_R] stacked along a leading relation axis; the
        # fused RGCN kernel streams (relation, Din-tile, Dout-tile) blocks.
        w3 = jnp.concatenate([w_self[None], w_rel], axis=0).astype(jnp.bfloat16)
        rgcn.append((w3, b.reshape(1, dout).astype(jnp.float32)))

    enc = _init_linear(keys[next(ki)], vae_input_dim, vae_h_dim)
    wm, bm = _init_linear(keys[next(ki)], vae_h_dim, vae_z_dim)
    wl, bl = _init_linear(keys[next(ki)], vae_h_dim, vae_z_dim)
    ml = (jnp.concatenate([wm, wl], axis=1),        # (h_dim, 2*z_dim)
          jnp.concatenate([bm, bl], axis=1))        # (1, 2*z_dim)
    dec1 = _init_linear(keys[next(ki)], vae_z_dim, vae_h_dim)
    dec2 = _init_linear(keys[next(ki)], vae_h_dim, vae_input_dim)
    vae = {"enc": enc, "ml": ml, "dec1": dec1, "dec2": dec2}
    return {"rgcn": rgcn, "vae": vae}


# ---------------------------------------------------------------------------
# Forward pass (mirrors Agent.forward's numeric path)
# ---------------------------------------------------------------------------

def build_normalized_adjacency(edge_index, edge_type, num_nodes, num_relations,
                               num_nodes_padded):
    # A[r, dst, src] = 1 per typed edge, mean-normalized per (relation, dst);
    # padded to the sublane-aligned node count, identity prepended (self term).
    A = jnp.zeros((num_relations, num_nodes, num_nodes), jnp.float32)
    A = A.at[edge_type, edge_index[1], edge_index[0]].add(1.0)
    deg = A.sum(axis=-1, keepdims=True)
    A = A / jnp.maximum(deg, 1.0)
    pad = num_nodes_padded - num_nodes
    A = jnp.pad(A, ((0, 0), (0, pad), (0, pad)))
    eye = jnp.eye(num_nodes_padded, dtype=jnp.float32)[None]
    return jnp.concatenate([eye, A], axis=0)         # (R+1, Np, Np)


def persona_encoder(params, node_features_padded, query_embedding, adj_full):
    # TODO(synk): real RGCN class is external; query conditioning here is an
    # additive broadcast of the query embedding onto the node features.
    h = (node_features_padded + query_embedding).astype(jnp.float32)
    n_layers = len(params["rgcn"])
    for i, (w3, b) in enumerate(params["rgcn"]):
        last = (i == n_layers - 1)
        h = rgcn_layer(h, adj_full, w3, b, relu=not last,
                       out_dtype=jnp.float32)
    # Agent.persona_encoder returns rgcn_output[0, :]
    return h[0, :]


def agent_forward(params, node_features, query_embedding, edge_index,
                  edge_type, vae_key, *, num_relations):
    num_nodes = node_features.shape[0]
    np_pad = max(16, ((num_nodes + 15) // 16) * 16)   # bf16 sublane packing
    adj_full = build_normalized_adjacency(edge_index, edge_type, num_nodes,
                                          num_relations, np_pad)
    nodes_p = jnp.pad(node_features, ((0, np_pad - num_nodes), (0, 0)))
    chatbot_embedding = persona_encoder(params, nodes_p, query_embedding,
                                        adj_full)
    vae_z, _ = vae_forward(params, query_embedding, vae_key)
    # TODO(synk): tokenizer prompt assembly, LLaMA embed_tokens and the frozen
    # LlamaForCausalLM forward (outputs.loss) have no Pallas equivalent here.
    return {"chatbot_embedding": chatbot_embedding, "vae_z": vae_z}


# ---------------------------------------------------------------------------
# Demo
# ---------------------------------------------------------------------------

if __name__ == "__main__":
    # Small shapes consistent with the module (real model uses D=4096).
    NUM_NODES = 8
    NUM_EDGES = 12
    NUM_RELATIONS = 3
    D = 128                 # node / query embedding dim (in_channels)
    HID = 128               # hidden_channels
    OUT = 128               # out_channels
    N_LAYERS = 2
    VAE_IN, VAE_H, VAE_Z = D, 128, 128

    key = jax.random.PRNGKey(0)
    k_param, k_nodes, k_query, k_src, k_dst, k_rel, k_eps = jax.random.split(key, 7)

    params = init_agent_params(
        k_param, num_relations=NUM_RELATIONS, in_ch=D, hid_ch=HID, out_ch=OUT,
        n_layers=N_LAYERS, vae_input_dim=VAE_IN, vae_h_dim=VAE_H,
        vae_z_dim=VAE_Z)

    # Synthetic stand-ins for the .npy node / query embedding libraries.
    node_features = jax.random.normal(k_nodes, (NUM_NODES, D), jnp.float32)
    query_embedding = jax.random.normal(k_query, (1, D), jnp.float32)
    edge_src = jax.random.randint(k_src, (NUM_EDGES,), 0, NUM_NODES)
    edge_dst = jax.random.randint(k_dst, (NUM_EDGES,), 0, NUM_NODES)
    edge_index = jnp.stack([edge_src, edge_dst], axis=0)       # (2, E)
    edge_type = jax.random.randint(k_rel, (NUM_EDGES,), 0, NUM_RELATIONS)

    forward = jax.jit(
        functools.partial(agent_forward, num_relations=NUM_RELATIONS))
    out = forward(params, node_features, query_embedding, edge_index,
                  edge_type, k_eps)
    jax.block_until_ready(out)

    assert out["chatbot_embedding"].shape == (OUT,)
    assert out["vae_z"].shape == (1, VAE_Z)
    assert jnp.all(jnp.isfinite(out["chatbot_embedding"]))
    assert jnp.all(jnp.isfinite(out["vae_z"]))
    print("KERNEL_OK")
</pallas_src>

<mosaic_0001>
module attributes {stable_mosaic.version = 11 : i64} {
  func.func @_vae_mid_kernel(%arg0: i32, %arg1: memref<1x128xbf16, #tpu.memory_space<vmem>>, %arg2: memref<128x256xbf16, #tpu.memory_space<vmem>>, %arg3: memref<1x256xf32, #tpu.memory_space<vmem>>, %arg4: memref<128x128xbf16, #tpu.memory_space<vmem>>, %arg5: memref<1x128xf32, #tpu.memory_space<vmem>>, %arg6: memref<1x128xf32, #tpu.memory_space<vmem>>, %arg7: memref<1x128xf32, #tpu.memory_space<vmem>>, %arg8: memref<1x128xbf16, #tpu.memory_space<vmem>>) attributes {dimension_semantics = [#tpu.dimension_semantics<arbitrary>], iteration_bounds = array<i64: 1>, scalar_prefetch = 0 : i64, scratch_operands = 0 : i64, tpu.core_type = #tpu.core_type<tc>, window_params = [{pipeline_mode = #tpu.pipeline_mode<synchronous>, transform_indices = @transform_0, window_bounds = array<i64: 1, 128>}, {pipeline_mode = #tpu.pipeline_mode<synchronous>, transform_indices = @transform_1, window_bounds = array<i64: 128, 256>}, {pipeline_mode = #tpu.pipeline_mode<synchronous>, transform_indices = @transform_2, window_bounds = array<i64: 1, 256>}, {pipeline_mode = #tpu.pipeline_mode<synchronous>, transform_indices = @transform_3, window_bounds = array<i64: 128, 128>}, {pipeline_mode = #tpu.pipeline_mode<synchronous>, transform_indices = @transform_4, window_bounds = array<i64: 1, 128>}, {pipeline_mode = #tpu.pipeline_mode<synchronous>, transform_indices = @transform_5, window_bounds = array<i64: 1, 128>}, {pipeline_mode = #tpu.pipeline_mode<synchronous>, transform_indices = @transform_6, window_bounds = array<i64: 1, 128>}, {pipeline_mode = #tpu.pipeline_mode<synchronous>, transform_indices = @transform_7, window_bounds = array<i64: 1, 128>}]} {
    %c0 = arith.constant 0 : index
    %c0_0 = arith.constant 0 : index
    %0 = vector.load %arg1[%c0, %c0_0] : memref<1x128xbf16, #tpu.memory_space<vmem>>, vector<1x128xbf16>
    %c0_1 = arith.constant 0 : index
    %c0_2 = arith.constant 0 : index
    %1 = vector.load %arg2[%c0_1, %c0_2] : memref<128x256xbf16, #tpu.memory_space<vmem>>, vector<128x256xbf16>
    %cst = arith.constant dense<0.000000e+00> : vector<1x256xf32>
    %2 = tpu.matmul %0, %1, %cst {dimension_numbers = #tpu.dot_dimension_numbers<[1], [0], [0], [1], [0, 0, 1, 1], [], []>} : vector<1x128xbf16>, vector<128x256xbf16>, vector<1x256xf32> -> vector<1x256xf32>
    %c0_3 = arith.constant 0 : index
    %c0_4 = arith.constant 0 : index
    %3 = vector.load %arg3[%c0_3, %c0_4] : memref<1x256xf32, #tpu.memory_space<vmem>>, vector<1x256xf32>
    %4 = arith.addf %2, %3 : vector<1x256xf32>
    %5 = vector.extract_strided_slice %4 {offsets = [0, 0], sizes = [1, 128], strides = [1, 1]} : vector<1x256xf32> to vector<1x128xf32>
    %6 = vector.extract_strided_slice %4 {offsets = [0, 128], sizes = [1, 128], strides = [1, 1]} : vector<1x256xf32> to vector<1x128xf32>
    %cst_5 = arith.constant 5.000000e-01 : f32
    %7 = vector.broadcast %cst_5 : f32 to vector<1x128xf32>
    %8 = arith.mulf %7, %6 : vector<1x128xf32>
    %9 = math.exp %8 : vector<1x128xf32>
    %c0_6 = arith.constant 0 : index
    %c0_7 = arith.constant 0 : index
    %10 = vector.load %arg6[%c0_6, %c0_7] : memref<1x128xf32, #tpu.memory_space<vmem>>, vector<1x128xf32>
    %11 = arith.mulf %9, %10 : vector<1x128xf32>
    %12 = arith.addf %5, %11 : vector<1x128xf32>
    %c0_8 = arith.constant 0 : index
    %c0_9 = arith.constant 0 : index
    %13 = vector.load %arg7[%c0_8, %c0_9] : memref<1x128xf32, #tpu.memory_space<vmem>>, vector<1x128xf32>
    tpu.vector_store %arg7[%c0_8, %c0_9], %12 {strides = array<i32>} : memref<1x128xf32, #tpu.memory_space<vmem>>, vector<1x128xf32>,
    %14 = arith.truncf %12 : vector<1x128xf32> to vector<1x128xbf16>
    %c0_10 = arith.constant 0 : index
    %c0_11 = arith.constant 0 : index
    %15 = vector.load %arg4[%c0_10, %c0_11] : memref<128x128xbf16, #tpu.memory_space<vmem>>, vector<128x128xbf16>
    %cst_12 = arith.constant dense<0.000000e+00> : vector<1x128xf32>
    %16 = tpu.matmul %14, %15, %cst_12 {dimension_numbers = #tpu.dot_dimension_numbers<[1], [0], [0], [1], [0, 0, 1, 1], [], []>} : vector<1x128xbf16>, vector<128x128xbf16>, vector<1x128xf32> -> vector<1x128xf32>
    %c0_13 = arith.constant 0 : index
    %c0_14 = arith.constant 0 : index
    %17 = vector.load %arg5[%c0_13, %c0_14] : memref<1x128xf32, #tpu.memory_space<vmem>>, vector<1x128xf32>
    %18 = arith.addf %16, %17 : vector<1x128xf32>
    %cst_15 = arith.constant 0.000000e+00 : f32
    %19 = vector.broadcast %cst_15 : f32 to vector<1x128xf32>
    %20 = arith.maximumf %18, %19 : vector<1x128xf32>
    %21 = arith.truncf %20 : vector<1x128xf32> to vector<1x128xbf16>
    %c0_16 = arith.constant 0 : index
    %c0_17 = arith.constant 0 : index
    %22 = vector.load %arg8[%c0_16, %c0_17] : memref<1x128xbf16, #tpu.memory_space<vmem>>, vector<1x128xbf16>
    tpu.vector_store %arg8[%c0_16, %c0_17], %21 {strides = array<i32>} : memref<1x128xbf16, #tpu.memory_space<vmem>>, vector<1x128xbf16>,
    return
  }
  func.func @transform_0(%arg0: i32) -> (i32, i32) {
    %c0_i32 = arith.constant 0 : i32
    %c0_i32_0 = arith.constant 0 : i32
    %c0_i32_1 = arith.constant 0 : i32
    return %c0_i32, %c0_i32_0 : i32, i32
  }
  func.func @transform_1(%arg0: i32) -> (i32, i32) {
    %c0_i32 = arith.constant 0 : i32
    %c0_i32_0 = arith.constant 0 : i32
    %c0_i32_1 = arith.constant 0 : i32
    return %c0_i32, %c0_i32_0 : i32, i32
  }
  func.func @transform_2(%arg0: i32) -> (i32, i32) {
    %c0_i32 = arith.constant 0 : i32
    %c0_i32_0 = arith.constant 0 : i32
    %c0_i32_1 = arith.constant 0 : i32
    return %c0_i32, %c0_i32_0 : i32, i32
  }
  func.func @transform_3(%arg0: i32) -> (i32, i32) {
    %c0_i32 = arith.constant 0 : i32
    %c0_i32_0 = arith.constant 0 : i32
    %c0_i32_1 = arith.constant 0 : i32
    return %c0_i32, %c0_i32_0 : i32, i32
  }
  func.func @transform_4(%arg0: i32) -> (i32, i32) {
    %c0_i32 = arith.constant 0 : i32
    %c0_i32_0 = arith.constant 0 : i32
    %c0_i32_1 = arith.constant 0 : i32
    return %c0_i32, %c0_i32_0 : i32, i32
  }
  func.func @transform_5(%arg0: i32) -> (i32, i32) {
    %c0_i32 = arith.constant 0 : i32
    %c0_i32_0 = arith.constant 0 : i32
    %c0_i32_1 = arith.constant 0 : i32
    return %c0_i32, %c0_i32_0 : i32, i32
  }
  func.func @transform_6(%arg0: i32) -> (i32, i32) {
    %c0_i32 = arith.constant 0 : i32
    %c0_i32_0 = arith.constant 0 : i32
    %c0_i32_1 = arith.constant 0 : i32
    return %c0_i32, %c0_i32_0 : i32, i32
  }
  func.func @transform_7(%arg0: i32) -> (i32, i32) {
    %c0_i32 = arith.constant 0 : i32
    %c0_i32_0 = arith.constant 0 : i32
    %c0_i32_1 = arith.constant 0 : i32
    return %c0_i32, %c0_i32_0 : i32, i32
  }
}

module attributes {stable_mosaic.version = 11 : i64} {
  func.func @_rgcn_layer_kernel(%arg0: i32, %arg1: i32, %arg2: i32, %arg3: memref<1x16x16xf32, #tpu.memory_space<vmem>>, %arg4: memref<16x128xf32, #tpu.memory_space<vmem>>, %arg5: memref<1x128x128xbf16, #tpu.memory_space<vmem>>, %arg6: memref<1x128xf32, #tpu.memory_space<vmem>>, %arg7: memref<16x128xf32, #tpu.memory_space<vmem>>, %arg8: memref<16x128xf32, #tpu.memory_space<vmem>>) attributes {dimension_semantics = [#tpu.dimension_semantics<parallel>, #tpu.dimension_semantics<arbitrary>, #tpu.dimension_semantics<arbitrary>], iteration_bounds = array<i64: 1, 4, 1>, scalar_prefetch = 0 : i64, scratch_operands = 1 : i64, tpu.core_type = #tpu.core_type<tc>, window_params = [{transform_indices = @transform_0, window_bounds = array<i64: 1, 16, 16>}, {transform_indices = @transform_1, window_bounds = array<i64: 16, 128>}, {transform_indices = @transform_2, window_bounds = array<i64: 1, 128, 128>}, {transform_indices = @transform_3, window_bounds = array<i64: 1, 128>}, {transform_indices = @transform_4, window_bounds = array<i64: 16, 128>}]} {
    %c0_i32 = arith.constant 0 : i32
    %0 = arith.cmpi eq, %arg1, %c0_i32 : i32
    %c0_i32_0 = arith.constant 0 : i32
    %1 = arith.cmpi eq, %arg2, %c0_i32_0 : i32
    %2 = arith.andi %0, %1 : i1
    %3 = arith.extui %2 : i1 to i32
    %c0_i32_1 = arith.constant 0 : i32
    %4 = arith.cmpi ne, %3, %c0_i32_1 : i32
    scf.if %4 {
      %cst_16 = arith.constant 0.000000e+00 : f32
      %21 = vector.broadcast %cst_16 : f32 to vector<16x128xf32>
      %c0_17 = arith.constant 0 : index
      %c0_18 = arith.constant 0 : index
      %22 = vector.load %arg8[%c0_17, %c0_18] : memref<16x128xf32, #tpu.memory_space<vmem>>, vector<16x128xf32>
      tpu.vector_store %arg8[%c0_17, %c0_18], %21 {strides = array<i32>} : memref<16x128xf32, #tpu.memory_space<vmem>>, vector<16x128xf32>,
    } else {
    }
    %c0 = arith.constant 0 : index
    %c0_2 = arith.constant 0 : index
    %c0_3 = arith.constant 0 : index
    %5 = vector.load %arg3[%c0, %c0_2, %c0_3] : memref<1x16x16xf32, #tpu.memory_space<vmem>>, vector<1x16x16xf32>
    %6 = vector.shape_cast %5 : vector<1x16x16xf32> to vector<16x16xf32>
    %c0_4 = arith.constant 0 : index
    %c0_5 = arith.constant 0 : index
    %7 = vector.load %arg4[%c0_4, %c0_5] : memref<16x128xf32, #tpu.memory_space<vmem>>, vector<16x128xf32>
    %cst = arith.constant dense<0.000000e+00> : vector<16x128xf32>
    %8 = tpu.matmul %6, %7, %cst {dimension_numbers = #tpu.dot_dimension_numbers<[1], [0], [0], [1], [0, 0, 1, 1], [], []>} : vector<16x16xf32>, vector<16x128xf32>, vector<16x128xf32> -> vector<16x128xf32>
    %c0_6 = arith.constant 0 : index
    %c0_7 = arith.constant 0 : index
    %9 = vector.load %arg8[%c0_6, %c0_7] : memref<16x128xf32, #tpu.memory_space<vmem>>, vector<16x128xf32>
    %10 = arith.truncf %8 : vector<16x128xf32> to vector<16x128xbf16>
    %c0_8 = arith.constant 0 : index
    %c0_9 = arith.constant 0 : index
    %c0_10 = arith.constant 0 : index
    %11 = vector.load %arg5[%c0_8, %c0_9, %c0_10] : memref<1x128x128xbf16, #tpu.memory_space<vmem>>, vector<1x128x128xbf16>
    %12 = vector.shape_cast %11 : vector<1x128x128xbf16> to vector<128x128xbf16>
    %cst_11 = arith.constant dense<0.000000e+00> : vector<16x128xf32>
    %13 = tpu.matmul %10, %12, %cst_11 {dimension_numbers = #tpu.dot_dimension_numbers<[1], [0], [0], [1], [0, 0, 1, 1], [], []>} : vector<16x128xbf16>, vector<128x128xbf16>, vector<16x128xf32> -> vector<16x128xf32>
    %14 = arith.addf %9, %13 : vector<16x128xf32>
    %c0_12 = arith.constant 0 : index
    %c0_13 = arith.constant 0 : index
    %15 = vector.load %arg8[%c0_12, %c0_13] : memref<16x128xf32, #tpu.memory_space<vmem>>, vector<16x128xf32>
    tpu.vector_store %arg8[%c0_12, %c0_13], %14 {strides = array<i32>} : memref<16x128xf32, #tpu.memory_space<vmem>>, vector<16x128xf32>,
    %c3_i32 = arith.constant 3 : i32
    %16 = arith.cmpi eq, %arg1, %c3_i32 : i32
    %c0_i32_14 = arith.constant 0 : i32
    %17 = arith.cmpi eq, %arg2, %c0_i32_14 : i32
    %18 = arith.andi %16, %17 : i1
    %19 = arith.extui %18 : i1 to i32
    %c0_i32_15 = arith.constant 0 : i32
    %20 = arith.cmpi ne, %19, %c0_i32_15 : i32
    scf.if %20 {
      %c0_16 = arith.constant 0 : index
      %c0_17 = arith.constant 0 : index
      %21 = vector.load %arg8[%c0_16, %c0_17] : memref<16x128xf32, #tpu.memory_space<vmem>>, vector<16x128xf32>
      %c0_18 = arith.constant 0 : index
      %c0_19 = arith.constant 0 : index
      %22 = vector.load %arg6[%c0_18, %c0_19] : memref<1x128xf32, #tpu.memory_space<vmem>>, vector<1x128xf32>
      %23 = vector.broadcast %22 : vector<1x128xf32> to vector<16x128xf32>
      %24 = arith.addf %21, %23 : vector<16x128xf32>
      %c0_20 = arith.constant 0 : index
      %c0_21 = arith.constant 0 : index
      %25 = vector.load %arg7[%c0_20, %c0_21] : memref<16x128xf32, #tpu.memory_space<vmem>>, vector<16x128xf32>
      tpu.vector_store %arg7[%c0_20, %c0_21], %24 {strides = array<i32>} : memref<16x128xf32, #tpu.memory_space<vmem>>, vector<16x128xf32>,
    } else {
    }
    return
  }
  func.func @transform_0(%arg0: i32, %arg1: i32, %arg2: i32) -> (i32, i32, i32) {
    %c0_i32 = arith.constant 0 : i32
    %c0_i32_0 = arith.constant 0 : i32
    %c0_i32_1 = arith.constant 0 : i32
    return %arg1, %c0_i32, %c0_i32_0 : i32, i32, i32
  }
  func.func @transform_1(%arg0: i32, %arg1: i32, %arg2: i32) -> (i32, i32) {
    %c0_i32 = arith.constant 0 : i32
    %c0_i32_0 = arith.constant 0 : i32
    return %c0_i32, %arg2 : i32, i32
  }
  func.func @transform_2(%arg0: i32, %arg1: i32, %arg2: i32) -> (i32, i32, i32) {
    %c0_i32 = arith.constant 0 : i32
    return %arg1, %arg2, %arg0 : i32, i32, i32
  }
  func.func @transform_3(%arg0: i32, %arg1: i32, %arg2: i32) -> (i32, i32) {
    %c0_i32 = arith.constant 0 : i32
    %c0_i32_0 = arith.constant 0 : i32
    return %c0_i32, %arg0 : i32, i32
  }
  func.func @transform_4(%arg0: i32, %arg1: i32, %arg2: i32) -> (i32, i32) {
    %c0_i32 = arith.constant 0 : i32
    %c0_i32_0 = arith.constant 0 : i32
    return %c0_i32, %arg0 : i32, i32
  }
}

module attributes {stable_mosaic.version = 11 : i64} {
  func.func @_matmul_bias_kernel(%arg0: i32, %arg1: i32, %arg2: memref<1x16x128xbf16, #tpu.memory_space<vmem>>, %arg3: memref<128x128xbf16, #tpu.memory_space<vmem>>, %arg4: memref<1x128xf32, #tpu.memory_space<vmem>>, %arg5: memref<16x128xbf16, #tpu.memory_space<vmem>>, %arg6: memref<16x128xf32, #tpu.memory_space<vmem>>) attributes {dimension_semantics = [#tpu.dimension_semantics<parallel>, #tpu.dimension_semantics<arbitrary>], iteration_bounds = array<i64: 1, 1>, scalar_prefetch = 0 : i64, scratch_operands = 1 : i64, tpu.core_type = #tpu.core_type<tc>, window_params = [{pipeline_mode = #tpu.pipeline_mode<synchronous>, transform_indices = @transform_0, window_bounds = array<i64: 1, 16, 128>}, {transform_indices = @transform_1, window_bounds = array<i64: 128, 128>}, {transform_indices = @transform_2, window_bounds = array<i64: 1, 128>}, {transform_indices = @transform_3, window_bounds = array<i64: 16, 128>}]} {
    %c0_i32 = arith.constant 0 : i32
    %0 = arith.cmpi eq, %arg1, %c0_i32 : i32
    %1 = arith.extui %0 : i1 to i32
    %c0_i32_0 = arith.constant 0 : i32
    %2 = arith.cmpi ne, %1, %c0_i32_0 : i32
    scf.if %2 {
      %cst_10 = arith.constant 0.000000e+00 : f32
      %14 = vector.broadcast %cst_10 : f32 to vector<16x128xf32>
      %c0_11 = arith.constant 0 : index
      %c0_12 = arith.constant 0 : index
      %15 = vector.load %arg6[%c0_11, %c0_12] : memref<16x128xf32, #tpu.memory_space<vmem>>, vector<16x128xf32>
      tpu.vector_store %arg6[%c0_11, %c0_12], %14 {strides = array<i32>} : memref<16x128xf32, #tpu.memory_space<vmem>>, vector<16x128xf32>,
    } else {
    }
    %c0 = arith.constant 0 : index
    %c0_1 = arith.constant 0 : index
    %3 = vector.load %arg6[%c0, %c0_1] : memref<16x128xf32, #tpu.memory_space<vmem>>, vector<16x128xf32>
    %4 = arith.index_cast %arg1 : i32 to index
    %c0_2 = arith.constant 0 : index
    %c0_3 = arith.constant 0 : index
    %5 = vector.load %arg2[%4, %c0_2, %c0_3] : memref<1x16x128xbf16, #tpu.memory_space<vmem>>, vector<1x16x128xbf16>
    %6 = vector.shape_cast %5 : vector<1x16x128xbf16> to vector<16x128xbf16>
    %c0_4 = arith.constant 0 : index
    %c0_5 = arith.constant 0 : index
    %7 = vector.load %arg3[%c0_4, %c0_5] : memref<128x128xbf16, #tpu.memory_space<vmem>>, vector<128x128xbf16>
    %cst = arith.constant dense<0.000000e+00> : vector<16x128xf32>
    %8 = tpu.matmul %6, %7, %cst {dimension_numbers = #tpu.dot_dimension_numbers<[1], [0], [0], [1], [0, 0, 1, 1], [], []>} : vector<16x128xbf16>, vector<128x128xbf16>, vector<16x128xf32> -> vector<16x128xf32>
    %9 = arith.addf %3, %8 : vector<16x128xf32>
    %c0_6 = arith.constant 0 : index
    %c0_7 = arith.constant 0 : index
    %10 = vector.load %arg6[%c0_6, %c0_7] : memref<16x128xf32, #tpu.memory_space<vmem>>, vector<16x128xf32>
    tpu.vector_store %arg6[%c0_6, %c0_7], %9 {strides = array<i32>} : memref<16x128xf32, #tpu.memory_space<vmem>>, vector<16x128xf32>,
    %c0_i32_8 = arith.constant 0 : i32
    %11 = arith.cmpi eq, %arg1, %c0_i32_8 : i32
    %12 = arith.extui %11 : i1 to i32
    %c0_i32_9 = arith.constant 0 : i32
    %13 = arith.cmpi ne, %12, %c0_i32_9 : i32
    scf.if %13 {
      %c0_10 = arith.constant 0 : index
      %c0_11 = arith.constant 0 : index
      %14 = vector.load %arg6[%c0_10, %c0_11] : memref<16x128xf32, #tpu.memory_space<vmem>>, vector<16x128xf32>
      %c0_12 = arith.constant 0 : index
      %c0_13 = arith.constant 0 : index
      %15 = vector.load %arg4[%c0_12, %c0_13] : memref<1x128xf32, #tpu.memory_space<vmem>>, vector<1x128xf32>
      %16 = vector.broadcast %15 : vector<1x128xf32> to vector<16x128xf32>
      %17 = arith.addf %14, %16 : vector<16x128xf32>
      %cst_14 = arith.constant 0.000000e+00 : f32
      %18 = vector.broadcast %cst_14 : f32 to vector<16x128xf32>
      %19 = arith.maximumf %17, %18 : vector<16x128xf32>
      %20 = arith.truncf %19 : vector<16x128xf32> to vector<16x128xbf16>
      %c0_15 = arith.constant 0 : index
      %c0_16 = arith.constant 0 : index
      %21 = vector.load %arg5[%c0_15, %c0_16] : memref<16x128xbf16, #tpu.memory_space<vmem>>, vector<16x128xbf16>
      tpu.vector_store %arg5[%c0_15, %c0_16], %20 {strides = array<i32>} : memref<16x128xbf16, #tpu.memory_space<vmem>>, vector<16x128xbf16>,
    } else {
    }
    return
  }
  func.func @transform_0(%arg0: i32, %arg1: i32) -> (i32, i32, i32) {
    %c0_i32 = arith.constant 0 : i32
    %c0_i32_0 = arith.constant 0 : i32
    %c0_i32_1 = arith.constant 0 : i32
    %c0_i32_2 = arith.constant 0 : i32
    return %c0_i32, %c0_i32_0, %c0_i32_1 : i32, i32, i32
  }
  func.func @transform_1(%arg0: i32, %arg1: i32) -> (i32, i32) {
    %c0_i32 = arith.constant 0 : i32
    return %arg1, %arg0 : i32, i32
  }
  func.func @transform_2(%arg0: i32, %arg1: i32) -> (i32, i32) {
    %c0_i32 = arith.constant 0 : i32
    %c0_i32_0 = arith.constant 0 : i32
    return %c0_i32, %arg0 : i32, i32
  }
  func.func @transform_3(%arg0: i32, %arg1: i32) -> (i32, i32) {
    %c0_i32 = arith.constant 0 : i32
    %c0_i32_0 = arith.constant 0 : i32
    return %c0_i32, %arg0 : i32, i32
  }
}

module attributes {stable_mosaic.version = 11 : i64} {
  func.func @_rgcn_layer_kernel(%arg0: i32, %arg1: i32, %arg2: i32, %arg3: memref<1x16x16xf32, #tpu.memory_space<vmem>>, %arg4: memref<16x128xf32, #tpu.memory_space<vmem>>, %arg5: memref<1x128x128xbf16, #tpu.memory_space<vmem>>, %arg6: memref<1x128xf32, #tpu.memory_space<vmem>>, %arg7: memref<16x128xf32, #tpu.memory_space<vmem>>, %arg8: memref<16x128xf32, #tpu.memory_space<vmem>>) attributes {dimension_semantics = [#tpu.dimension_semantics<parallel>, #tpu.dimension_semantics<arbitrary>, #tpu.dimension_semantics<arbitrary>], iteration_bounds = array<i64: 1, 4, 1>, scalar_prefetch = 0 : i64, scratch_operands = 1 : i64, tpu.core_type = #tpu.core_type<tc>, window_params = [{transform_indices = @transform_0, window_bounds = array<i64: 1, 16, 16>}, {transform_indices = @transform_1, window_bounds = array<i64: 16, 128>}, {transform_indices = @transform_2, window_bounds = array<i64: 1, 128, 128>}, {transform_indices = @transform_3, window_bounds = array<i64: 1, 128>}, {transform_indices = @transform_4, window_bounds = array<i64: 16, 128>}]} {
    %c0_i32 = arith.constant 0 : i32
    %0 = arith.cmpi eq, %arg1, %c0_i32 : i32
    %c0_i32_0 = arith.constant 0 : i32
    %1 = arith.cmpi eq, %arg2, %c0_i32_0 : i32
    %2 = arith.andi %0, %1 : i1
    %3 = arith.extui %2 : i1 to i32
    %c0_i32_1 = arith.constant 0 : i32
    %4 = arith.cmpi ne, %3, %c0_i32_1 : i32
    scf.if %4 {
      %cst_16 = arith.constant 0.000000e+00 : f32
      %21 = vector.broadcast %cst_16 : f32 to vector<16x128xf32>
      %c0_17 = arith.constant 0 : index
      %c0_18 = arith.constant 0 : index
      %22 = vector.load %arg8[%c0_17, %c0_18] : memref<16x128xf32, #tpu.memory_space<vmem>>, vector<16x128xf32>
      tpu.vector_store %arg8[%c0_17, %c0_18], %21 {strides = array<i32>} : memref<16x128xf32, #tpu.memory_space<vmem>>, vector<16x128xf32>,
    } else {
    }
    %c0 = arith.constant 0 : index
    %c0_2 = arith.constant 0 : index
    %c0_3 = arith.constant 0 : index
    %5 = vector.load %arg3[%c0, %c0_2, %c0_3] : memref<1x16x16xf32, #tpu.memory_space<vmem>>, vector<1x16x16xf32>
    %6 = vector.shape_cast %5 : vector<1x16x16xf32> to vector<16x16xf32>
    %c0_4 = arith.constant 0 : index
    %c0_5 = arith.constant 0 : index
    %7 = vector.load %arg4[%c0_4, %c0_5] : memref<16x128xf32, #tpu.memory_space<vmem>>, vector<16x128xf32>
    %cst = arith.constant dense<0.000000e+00> : vector<16x128xf32>
    %8 = tpu.matmul %6, %7, %cst {dimension_numbers = #tpu.dot_dimension_numbers<[1], [0], [0], [1], [0, 0, 1, 1], [], []>} : vector<16x16xf32>, vector<16x128xf32>, vector<16x128xf32> -> vector<16x128xf32>
    %c0_6 = arith.constant 0 : index
    %c0_7 = arith.constant 0 : index
    %9 = vector.load %arg8[%c0_6, %c0_7] : memref<16x128xf32, #tpu.memory_space<vmem>>, vector<16x128xf32>
    %10 = arith.truncf %8 : vector<16x128xf32> to vector<16x128xbf16>
    %c0_8 = arith.constant 0 : index
    %c0_9 = arith.constant 0 : index
    %c0_10 = arith.constant 0 : index
    %11 = vector.load %arg5[%c0_8, %c0_9, %c0_10] : memref<1x128x128xbf16, #tpu.memory_space<vmem>>, vector<1x128x128xbf16>
    %12 = vector.shape_cast %11 : vector<1x128x128xbf16> to vector<128x128xbf16>
    %cst_11 = arith.constant dense<0.000000e+00> : vector<16x128xf32>
    %13 = tpu.matmul %10, %12, %cst_11 {dimension_numbers = #tpu.dot_dimension_numbers<[1], [0], [0], [1], [0, 0, 1, 1], [], []>} : vector<16x128xbf16>, vector<128x128xbf16>, vector<16x128xf32> -> vector<16x128xf32>
    %14 = arith.addf %9, %13 : vector<16x128xf32>
    %c0_12 = arith.constant 0 : index
    %c0_13 = arith.constant 0 : index
    %15 = vector.load %arg8[%c0_12, %c0_13] : memref<16x128xf32, #tpu.memory_space<vmem>>, vector<16x128xf32>
    tpu.vector_store %arg8[%c0_12, %c0_13], %14 {strides = array<i32>} : memref<16x128xf32, #tpu.memory_space<vmem>>, vector<16x128xf32>,
    %c3_i32 = arith.constant 3 : i32
    %16 = arith.cmpi eq, %arg1, %c3_i32 : i32
    %c0_i32_14 = arith.constant 0 : i32
    %17 = arith.cmpi eq, %arg2, %c0_i32_14 : i32
    %18 = arith.andi %16, %17 : i1
    %19 = arith.extui %18 : i1 to i32
    %c0_i32_15 = arith.constant 0 : i32
    %20 = arith.cmpi ne, %19, %c0_i32_15 : i32
    scf.if %20 {
      %c0_16 = arith.constant 0 : index
      %c0_17 = arith.constant 0 : index
      %21 = vector.load %arg8[%c0_16, %c0_17] : memref<16x128xf32, #tpu.memory_space<vmem>>, vector<16x128xf32>
      %c0_18 = arith.constant 0 : index
      %c0_19 = arith.constant 0 : index
      %22 = vector.load %arg6[%c0_18, %c0_19] : memref<1x128xf32, #tpu.memory_space<vmem>>, vector<1x128xf32>
      %23 = vector.broadcast %22 : vector<1x128xf32> to vector<16x128xf32>
      %24 = arith.addf %21, %23 : vector<16x128xf32>
      %cst_20 = arith.constant 0.000000e+00 : f32
      %25 = vector.broadcast %cst_20 : f32 to vector<16x128xf32>
      %26 = arith.maximumf %24, %25 : vector<16x128xf32>
      %c0_21 = arith.constant 0 : index
      %c0_22 = arith.constant 0 : index
      %27 = vector.load %arg7[%c0_21, %c0_22] : memref<16x128xf32, #tpu.memory_space<vmem>>, vector<16x128xf32>
      tpu.vector_store %arg7[%c0_21, %c0_22], %26 {strides = array<i32>} : memref<16x128xf32, #tpu.memory_space<vmem>>, vector<16x128xf32>,
    } else {
    }
    return
  }
  func.func @transform_0(%arg0: i32, %arg1: i32, %arg2: i32) -> (i32, i32, i32) {
    %c0_i32 = arith.constant 0 : i32
    %c0_i32_0 = arith.constant 0 : i32
    %c0_i32_1 = arith.constant 0 : i32
    return %arg1, %c0_i32, %c0_i32_0 : i32, i32, i32
  }
  func.func @transform_1(%arg0: i32, %arg1: i32, %arg2: i32) -> (i32, i32) {
    %c0_i32 = arith.constant 0 : i32
    %c0_i32_0 = arith.constant 0 : i32
    return %c0_i32, %arg2 : i32, i32
  }
  func.func @transform_2(%arg0: i32, %arg1: i32, %arg2: i32) -> (i32, i32, i32) {
    %c0_i32 = arith.constant 0 : i32
    return %arg1, %arg2, %arg0 : i32, i32, i32
  }
  func.func @transform_3(%arg0: i32, %arg1: i32, %arg2: i32) -> (i32, i32) {
    %c0_i32 = arith.constant 0 : i32
    %c0_i32_0 = arith.constant 0 : i32
    return %c0_i32, %arg0 : i32, i32
  }
  func.func @transform_4(%arg0: i32, %arg1: i32, %arg2: i32) -> (i32, i32) {
    %c0_i32 = arith.constant 0 : i32
    %c0_i32_0 = arith.constant 0 : i32
    return %c0_i32, %arg0 : i32, i32
  }
}

</mosaic_0001>

<llo_original>
// kernel: agent_forward.5
$region0: #{agent_forward.5}
  #allocation0 [shape = 'u32[]', space=smem, size = 0x4, offset = 0x4, fixed_abs, tag = 'smem constant byte address 0x4 - core index']
  #allocation1 [shape = 'u32[144,128]{1,0:T(1,128)}', space=vmem, size = 0x12000, scoped, tag = 'internal scratch']
  #allocation2 [shape = 'f32[16,128]{1,0:T(8,128)}', space=vmem, size = 0x2000, scoped, tag = 'scratch operand']
  %s0 = inlined_call_operand.vmem [shape: f32[4,16,16], index: 0, kind: input, shape index: {}]
  %s1 = inlined_call_operand.vmem [shape: f32[16,128], index: 1, kind: input, shape index: {}]
  %s2 = inlined_call_operand.vmem [shape: bf16[4,128,128], index: 2, kind: input, shape index: {}]
  %s3 = inlined_call_operand.vmem [shape: f32[1,128], index: 3, kind: input, shape index: {}]
  %s4 = inlined_call_operand.vmem [shape: f32[16,128], index: 4, kind: output, shape index: {}]
  %s5 = sld [smem:[#allocation0]]
  $region57: #{agent_forward.5} parent=0
    _
  %s7 = ssub.s32 1, %s5
  %s8 = scalar_select 0, %s7, %s5
  loop: start=0, step=1, limit=6
  $region2: #{agent_forward.5} parent=0 // loop_pre_header
    _
  $region3: #{agent_forward.5} parent=0 // loop_header
    %s10 = sphi 0, %s14
    %p11 = scmp.ge.s32.totalorder %s10, 6
    %s17 = sphi 0, %s36
    %s18 = sphi 0, %s32
    %s19 = sphi 0, %s28
    %s20 = sphi 0, %s17
    %s21 = sphi 0, %s18
    %s22 = sphi 0, %s19
    %s23 = sphi 0, %s20
    %s24 = sphi 0, %s21
    %s25 = sphi 0, %s22
    %s39 = sphi 0, %s41
    %s42 = sphi 0, %s39
    %s43 = sphi 0, %s42
    %s59 = sphi 0, %s43
    %s65 = sphi 0, %s67
    %s68 = sphi 0, %s65
    %s69 = sphi 0, %s68
    %s85 = sphi 0, %s69
    %s95 = sphi 0, %s97
    %s98 = sphi 0, %s95
    %s99 = sphi 0, %s98
    %s115 = sphi 0, %s99
    %s121 = sphi 0, %s123
    %s124 = sphi 0, %s121
    %s125 = sphi 0, %s124
    %s141 = sphi 0, %s125
    %s147 = sphi 0, %s149
    %s150 = sphi 0, %s147
    %s151 = sphi 0, %s150
    %s167 = sphi 0, %s151
  $region4: #{agent_forward.5} parent=0 // loop_header_branch
    %13 = sbr.rel (%p11) target = $region8
  $region5: #{agent_forward.5} parent=0 // loop_body
    %s15 = ssub.s32 %s10, 1
    %s16 = ssub.s32 %s10, 2
    %s26 = sadd.s32 1, %s19
    %p27 = scmp.ge.s32.totalorder %s26, 1
    %s28 = scalar_select %p27, 0, %s26
    %s29 = sadd.s32 1, %s18
    %s30 = scalar_select %p27, %s29, %s18
    %p31 = scmp.ge.s32.totalorder %s30, 4
    %s32 = scalar_select %p31, 0, %s30
    %s33 = sadd.s32 1, %s17
    %s34 = scalar_select %p31, %s33, %s17
    %p35 = scmp.ge.s32.totalorder %s34, 1
    %s36 = scalar_select %p35, 0, %s34
    %s37 = ssub.s32 %s18, %s32
    %p38 = scmp.eq.s32.totalorder %s37, 0
    %s40 = sadd.s32 %s39, 1
    %s41 = scalar_select %p38, %s39, %s40
    %p44 = pneg %p38
    %p45 = scmp.eq.s32.totalorder %s10, 3
    %p46 = por %p44, %p45
    %p47 = scmp.ne.s32.totalorder %s39, %s42
    %p48 = scmp.eq.s32.totalorder %s10, 0
    %p49 = por %p47, %p48
    %p50 = scmp.ne.s32.totalorder %s39, %s42
    %p51 = scmp.eq.s32.totalorder %s15, 3
    %p52 = por %p50, %p51
    %p53 = scmp.ne.s32.totalorder %s42, %s43
    %p54 = scmp.eq.s32.totalorder %s15, 0
    %p55 = por %p53, %p54
    %p56 = scmp.ne.s32.totalorder %s42, %s43
    %p57 = scmp.eq.s32.totalorder %s16, 3
    %p58 = por %p56, %p57
    %p60 = scmp.ne.s32.totalorder %s43, %s59
    %p61 = scmp.eq.s32.totalorder %s16, 0
    %p62 = por %p60, %p61
    %s63 = ssub.s32 %s19, %s28
    %p64 = scmp.eq.s32.totalorder %s63, 0
    %s66 = sadd.s32 %s65, 1
    %s67 = scalar_select %p64, %s65, %s66
    %p70 = pneg %p64
    %p71 = scmp.eq.s32.totalorder %s10, 3
    %p72 = por %p70, %p71
    %p73 = scmp.ne.s32.totalorder %s65, %s68
    %p74 = scmp.eq.s32.totalorder %s10, 0
    %p75 = por %p73, %p74
    %p76 = scmp.ne.s32.totalorder %s65, %s68
    %p77 = scmp.eq.s32.totalorder %s15, 3
    %p78 = por %p76, %p77
    %p79 = scmp.ne.s32.totalorder %s68, %s69
    %p80 = scmp.eq.s32.totalorder %s15, 0
    %p81 = por %p79, %p80
    %p82 = scmp.ne.s32.totalorder %s68, %s69
    %p83 = scmp.eq.s32.totalorder %s16, 3
    %p84 = por %p82, %p83
    %p86 = scmp.ne.s32.totalorder %s69, %s85
    %p87 = scmp.eq.s32.totalorder %s16, 0
    %p88 = por %p86, %p87
    %s89 = ssub.s32 %s18, %s32
    %s90 = ssub.s32 %s19, %s28
    %s91 = sor.u32 %s89, %s90
    %s92 = ssub.s32 %s17, %s36
    %s93 = sor.u32 %s91, %s92
    %p94 = scmp.eq.s32.totalorder %s93, 0
    %s96 = sadd.s32 %s95, 1
    %s97 = scalar_select %p94, %s95, %s96
    %p100 = pneg %p94
    %p101 = scmp.eq.s32.totalorder %s10, 3
    %p102 = por %p100, %p101
    %p103 = scmp.ne.s32.totalorder %s95, %s98
    %p104 = scmp.eq.s32.totalorder %s10, 0
    %p105 = por %p103, %p104
    %p106 = scmp.ne.s32.totalorder %s95, %s98
    %p107 = scmp.eq.s32.totalorder %s15, 3
    %p108 = por %p106, %p107
    %p109 = scmp.ne.s32.totalorder %s98, %s99
    %p110 = scmp.eq.s32.totalorder %s15, 0
    %p111 = por %p109, %p110
    %p112 = scmp.ne.s32.totalorder %s98, %s99
    %p113 = scmp.eq.s32.totalorder %s16, 3
    %p114 = por %p112, %p113
    %p116 = scmp.ne.s32.totalorder %s99, %s115
    %p117 = scmp.eq.s32.totalorder %s16, 0
    %p118 = por %p116, %p117
    %s119 = ssub.s32 %s17, %s36
    %p120 = scmp.eq.s32.totalorder %s119, 0
    %s122 = sadd.s32 %s121, 1
    %s123 = scalar_select %p120, %s121, %s122
    %p126 = pneg %p120
    %p127 = scmp.eq.s32.totalorder %s10, 3
    %p128 = por %p126, %p127
    %p129 = scmp.ne.s32.totalorder %s121, %s124
    %p130 = scmp.eq.s32.totalorder %s10, 0
    %p131 = por %p129, %p130
    %p132 = scmp.ne.s32.totalorder %s121, %s124
    %p133 = scmp.eq.s32.totalorder %s15, 3
    %p134 = por %p132, %p133
    %p135 = scmp.ne.s32.totalorder %s124, %s125
    %p136 = scmp.eq.s32.totalorder %s15, 0
    %p137 = por %p135, %p136
    %p138 = scmp.ne.s32.totalorder %s124, %s125
    %p139 = scmp.eq.s32.totalorder %s16, 3
    %p140 = por %p138, %p139
    %p142 = scmp.ne.s32.totalorder %s125, %s141
    %p143 = scmp.eq.s32.totalorder %s16, 0
    %p144 = por %p142, %p143
    %s145 = ssub.s32 %s17, %s36
    %p146 = scmp.eq.s32.totalorder %s145, 0
    %s148 = sadd.s32 %s147, 1
    %s149 = scalar_select %p146, %s147, %s148
    %p152 = pneg %p146
    %p153 = scmp.eq.s32.totalorder %s10, 3
    %p154 = por %p152, %p153
    %p155 = scmp.ne.s32.totalorder %s147, %s150
    %p156 = scmp.eq.s32.totalorder %s10, 0
    %p157 = por %p155, %p156
    %p158 = scmp.ne.s32.totalorder %s147, %s150
    %p159 = scmp.eq.s32.totalorder %s15, 3
    %p160 = por %p158, %p159
    %p161 = scmp.ne.s32.totalorder %s150, %s151
    %p162 = scmp.eq.s32.totalorder %s15, 0
    %p163 = por %p161, %p162
    %p164 = scmp.ne.s32.totalorder %s150, %s151
    %p165 = scmp.eq.s32.totalorder %s16, 3
    %p166 = por %p164, %p165
    %p168 = scmp.ne.s32.totalorder %s151, %s167
    %p169 = scmp.eq.s32.totalorder %s16, 0
    %p170 = por %p168, %p169
    %p171 = scmp.le.s32.totalorder 1, %s10
    %p172 = scmp.lt.s32.totalorder %s10, 5
    %p173 = pnand %p171, %p172
    %p174 = pneg %p173
    // Predicated region
    $region9: #{agent_forward.5} parent=5 // pred_check
      _
    $region10: #{agent_forward.5} parent=5 // pred_check_branch
      %176 = sbr.rel (%p173) target = $region12
    $region11: #{agent_forward.5} parent=5 // pred_region
      %s177 = ssub.s32 %s10, 1
      // Predicated region
      $region13: #{agent_forward.5} parent=11 // pred_check
        %p178 = pneg %p81
      $region14: #{agent_forward.5} parent=11 // pred_check_branch
        %180 = sbr.rel (%p178) target = $region16
      $region15: #{agent_forward.5} parent=11 // pred_region
        %p181 = scmp.lt.s32.totalorder %s22, 0
        %s182 = scalar_select %p181, %s22, 0
        %s183 = smul.addr %s182, 8
        %s184 = scalar_lea.vmem %s1, %s183
      $region16: #{agent_forward.5} parent=11 // pred_fallthru
        _
      // Predicated region
      $region17: #{agent_forward.5} parent=11 // pred_check
        %p185 = pneg %p137
      $region18: #{agent_forward.5} parent=11 // pred_check_branch
        %187 = sbr.rel (%p185) target = $region20
      $region19: #{agent_forward.5} parent=11 // pred_region
        %p188 = scmp.lt.s32.totalorder %s20, 0
        %s189 = scalar_select %p188, %s20, 0
        %s190 = scalar_lea.vmem %s3, %s189
      $region20: #{agent_forward.5} parent=11 // pred_fallthru
        _
    $region12: #{agent_forward.5} parent=5 // pred_fallthru
      _
    %p191 = scmp.lt.s32.totalorder %s10, 4
    // Predicated region
    $region21: #{agent_forward.5} parent=5 // pred_check
      %p192 = pneg %p191
    $region22: #{agent_forward.5} parent=5 // pred_check_branch
      %194 = sbr.rel (%p192) target = $region24
    $region23: #{agent_forward.5} parent=5 // pred_region
      // Predicated region
      $region25: #{agent_forward.5} parent=23 // pred_check
        %p195 = pneg %p49
      $region26: #{agent_forward.5} parent=23 // pred_check_branch
        %197 = sbr.rel (%p195) target = $region28
      $region27: #{agent_forward.5} parent=23 // pred_region
        %p198 = scmp.lt.s32.totalorder %s18, 3
        %s199 = scalar_select %p198, %s18, 3
        %s200 = smul.addr %s199, 2
        %s201 = smul.addr %s200, 8
        %s202 = scalar_lea.vmem %s0, %s201
      $region28: #{agent_forward.5} parent=23 // pred_fallthru
        _
      // Predicated region
      $region29: #{agent_forward.5} parent=23 // pred_check
        %p203 = pneg %p105
      $region30: #{agent_forward.5} parent=23 // pred_check_branch
        %205 = sbr.rel (%p203) target = $region32
      $region31: #{agent_forward.5} parent=23 // pred_region
        %s206 = smul.u32 16, %s19
        %p207 = scmp.lt.s32.totalorder %s18, 3
        %s208 = scalar_select %p207, %s18, 3
        %p209 = scmp.lt.s32.totalorder %s206, 15
        %s210 = scalar_select %p209, %s206, 15
        %p211 = scmp.lt.s32.totalorder %s17, 0
        %s212 = scalar_select %p211, %s17, 0
        %s213 = sadd.s32 %s212, %s210
        %s214 = smul.addr %s208, 16
        %s215 = sadd.s32 %s213, %s214
        %s216 = smul.addr %s215, 4
        %s217 = scalar_lea.vmem %s2, %s216
        %s218 = smul.u32 16, %s19
      $region32: #{agent_forward.5} parent=23 // pred_fallthru
        _
    $region24: #{agent_forward.5} parent=5 // pred_fallthru
      _
    %p219 = scmp.le.s32.totalorder 1, %s10
    %p220 = scmp.lt.s32.totalorder %s10, 5
    %p221 = pnand %p219, %p220
    %p222 = pneg %p221
    // Predicated region
    $region33: #{agent_forward.5} parent=5 // pred_check
      _
    $region34: #{agent_forward.5} parent=5 // pred_check_branch
      %224 = sbr.rel (%p221) target = $region36
    $region35: #{agent_forward.5} parent=5 // pred_region
      %s225 = ssub.s32 %s10, 1
      %p226 = scmp.lt.s32.totalorder %s21, 3
      %s227 = scalar_select %p226, %s21, 3
      %s228 = smul.addr %s227, 2
      %s229 = smul.addr %s228, 8
      %s230 = scalar_lea.vmem %s0, %s229
      %p231 = pneg %p55
      %p232 = pneg %p52
      %p233 = scmp.lt.s32.totalorder %s22, 0
      %s234 = scalar_select %p233, %s22, 0
      %s235 = smul.addr %s234, 8
      %s236 = scalar_lea.vmem %s1, %s235
      %p237 = pneg %p81
      %p238 = pneg %p78
      %s239 = smul.u32 16, %s22
      %p240 = scmp.lt.s32.totalorder %s21, 3
      %s241 = scalar_select %p240, %s21, 3
      %p242 = scmp.lt.s32.totalorder %s239, 15
      %s243 = scalar_select %p242, %s239, 15
      %p244 = scmp.lt.s32.totalorder %s20, 0
      %s245 = scalar_select %p244, %s20, 0
      %s246 = sadd.s32 %s245, %s243
      %s247 = smul.addr %s241, 16
      %s248 = sadd.s32 %s246, %s247
      %s249 = smul.addr %s248, 4
      %s250 = scalar_lea.vmem %s2, %s249
      %p251 = pneg %p111
      %p252 = pneg %p108
      %p253 = scmp.lt.s32.totalorder %s20, 0
      %s254 = scalar_select %p253, %s20, 0
      %s255 = scalar_lea.vmem %s3, %s254
      %p256 = pneg %p137
      %p257 = pneg %p134
      %p258 = pneg %p163
      %p259 = pneg %p160
      %p260 = scmp.lt.s32.totalorder %s20, 0
      %s261 = scalar_select %p260, %s20, 0
      %s262 = smul.addr %s261, 8
      %s263 = scalar_lea.vmem %s4, %s262
      %p264 = scmp.lt.s32.totalorder %s21, 3
      %s265 = scalar_select %p264, %s21, 3
      %s266 = smul.addr %s265, 2
      %s267 = smul.addr %s266, 8
      %s268 = scalar_lea.vmem %s0, %s267
      %p269 = scmp.lt.s32.totalorder %s22, 0
      %s270 = scalar_select %p269, %s22, 0
      %s271 = smul.addr %s270, 8
      %s272 = scalar_lea.vmem %s1, %s271
      %s273 = smul.u32 16, %s22
      %p274 = scmp.lt.s32.totalorder %s21, 3
      %s275 = scalar_select %p274, %s21, 3
      %p276 = scmp.lt.s32.totalorder %s273, 15
      %s277 = scalar_select %p276, %s273, 15
      %p278 = scmp.lt.s32.totalorder %s20, 0
      %s279 = scalar_select %p278, %s20, 0
      %s280 = sadd.s32 %s279, %s277
      %s281 = smul.addr %s275, 16
      %s282 = sadd.s32 %s280, %s281
      %s283 = smul.addr %s282, 4
      %s284 = scalar_lea.vmem %s2, %s283
      %s285 = smul.u32 16, %s22
      %p286 = scmp.lt.s32.totalorder %s20, 0
      %s287 = scalar_select %p286, %s20, 0
      %s288 = scalar_lea.vmem %s3, %s287
      %p289 = scmp.lt.s32.totalorder %s20, 0
      %s290 = scalar_select %p289, %s20, 0
      %s291 = smul.addr %s290, 8
      %s292 = scalar_lea.vmem %s4, %s291
      %p294 = scmp.eq.s32.totalorder %s21, 0
      %p295 = scmp.eq.s32.totalorder %s22, 0
      %p296 = pnand %p294, %p295
      %p297 = pneg %p296
      // Predicated region
      $region37: #{agent_forward.5} parent=35 // pred_check
        _
      $region38: #{agent_forward.5} parent=35 // pred_check_branch
        %299 = sbr.rel (%p296) target = $region40
      $region39: #{agent_forward.5} parent=35 // pred_region
        %300 = vst [vmem:[#allocation2] sm:$0xff] 0.0
        %301 = vst [vmem:[#allocation2 + $0x8] sm:$0xff] 0.0
      $region40: #{agent_forward.5} parent=35 // pred_fallthru
        _
      %v302 = vld [vmem:[%s268] sm:$0xff]
      %v303 = vld [vmem:[%s268 + $0x8] sm:$0xff]
      %v304 = vld [vmem:[%s272] sm:$0xff]
      %v305 = vld [vmem:[%s272 + $0x8] sm:$0xff]
      %vm306 = vcmask 130048
      %v308 = vsel %vm306, %v302, 0
      %v311 = vsel %vm306, %v303, 0
      %313 = vmatprep.subr.mxu0 0.0
      %314 = vmatpush1.msra.mxu0 %v304
      %315 = vmatprep.subr.mxu0 0.0
      %316 = vmatpush1.msra.mxu0 %v305
      %317 = vmatprep.subr.mxu0 0.0
      %318 = vmatpush1.msra.mxu0 0.0
      %319 = vmatprep.subr.mxu0 0.0
      %320 = vmatpush1.msra.mxu0 0.0
      %321 = vmatprep.subr.mxu0 0.0
      %322 = vmatpush1.msra.mxu0 0.0
      %323 = vmatprep.subr.mxu0 0.0
      %324 = vmatpush1.msra.mxu0 0.0
      %325 = vmatprep.subr.mxu0 0.0
      %326 = vmatpush1.msra.mxu0 0.0
      %327 = vmatprep.subr.mxu0 0.0
      %328 = vmatpush1.msra.mxu0 0.0
      %329 = vmatprep.subr.mxu0 0.0
      %330 = vmatpush1.msra.mxu0 0.0
      %331 = vmatprep.subr.mxu0 0.0
      %332 = vmatpush1.msra.mxu0 0.0
      %333 = vmatprep.subr.mxu0 0.0
      %334 = vmatpush1.msra.mxu0 0.0
      %335 = vmatprep.subr.mxu0 0.0
      %336 = vmatpush1.msra.mxu0 0.0
      %337 = vmatprep.subr.mxu0 0.0
      %338 = vmatpush1.msra.mxu0 0.0
      %339 = vmatprep.subr.mxu0 0.0
      %340 = vmatpush1.msra.mxu0 0.0
      %341 = vmatprep.subr.mxu0 0.0
      %342 = vmatpush1.msra.mxu0 0.0
      %343 = vmatprep.subr.mxu0 0.0
      %344 = vmatpush1.msra.mxu0 0.0
      %345 = vmatprep.subr.mxu0 0.0
      %346 = vmatpush1.msra.mxu0 0.0
      %347 = vmatprep.subr.mxu0 0.0
      %348 = vmatpush1.msra.mxu0 0.0
      %349 = vmatprep.subr.mxu0 0.0
      %350 = vmatpush1.msra.mxu0 0.0
      %351 = vmatprep.subr.mxu0 0.0
      %352 = vmatpush1.msra.mxu0 0.0
      %353 = vmatprep.subr.mxu0 0.0
      %354 = vmatpush1.msra.mxu0 0.0
      %355 = vmatprep.subr.mxu0 0.0
      %356 = vmatpush1.msra.mxu0 0.0
      %357 = vmatprep.subr.mxu0 0.0
      %358 = vmatpush1.msra.mxu0 0.0
      %359 = vmatprep.subr.mxu0 0.0
      %360 = vmatpush1.msra.mxu0 0.0
      %361 = vmatprep.subr.mxu0 0.0
      %362 = vmatpush1.msra.mxu0 0.0
      %363 = vmatprep.subr.mxu0 0.0
      %364 = vmatpush1.msra.mxu0 0.0
      %365 = vmatprep.subr.mxu0 0.0
      %366 = vmatpush1.msra.mxu0 0.0
      %367 = vmatprep.subr.mxu0 0.0
      %368 = vmatpush1.msra.mxu0 0.0
      %369 = vmatprep.subr.mxu0 0.0
      %370 = vmatpush1.msra.mxu0 0.0
      %371 = vmatprep.subr.mxu0 0.0
      %372 = vmatpush1.msra.mxu0 0.0
      %373 = vmatprep.subr.mxu0 0.0
      %374 = vmatpush1.msra.mxu0 0.0
      %375 = vmatprep.subr.mxu0 0.0
      %376 = vmatpush1.msra.mxu0 0.0
      %377 = vmatprep.mubr.f32.mxu0 0.0
      %378 = vmatmul.mubr.f32.gmra.mrb[0].mxu0 %v308
      %v379 = vpop.f32.mrb[0].mxu0
      %v380 = vadd.f32 0.0, %v379
      %v381 = vpop.f32.mrb[0].mxu0
      %382 = vmatprep.mubr.f32.mxu0 0.0
      %383 = vmatmul.mubr.f32.gmra.mrb[0].mxu0 %v311
      %v384 = vpop.f32.mrb[0].mxu0
      %v385 = vadd.f32 0.0, %v384
      %v386 = vpop.f32.mrb[0].mxu0
      %387 = vdwg.mxu0
      %v388 = vld [vmem:[#allocation2] sm:$0xff]
      %v389 = vld [vmem:[#allocation2 + $0x8] sm:$0xff]
      %v390 = vpack.c.bf16 %v385, %v380
      %v391 = vld [vmem:[%s284] sm:$0xf]
      %v392 = vld [vmem:[%s284 + $0x4] sm:$0xf]
      %v393 = vld [vmem:[%s284 + $0x8] sm:$0xf]
      %v394 = vld [vmem:[%s284 + $0xc] sm:$0xf]
      %v395 = vld [vmem:[%s284 + $0x10] sm:$0xf]
      %v396 = vld [vmem:[%s284 + $0x14] sm:$0xf]
      %v397 = vld [vmem:[%s284 + $0x18] sm:$0xf]
      %v398 = vld [vmem:[%s284 + $0x1c] sm:$0xf]
      %v399 = vld [vmem:[%s284 + $0x20] sm:$0xf]
      %v400 = vld [vmem:[%s284 + $0x24] sm:$0xf]
      %v401 = vld [vmem:[%s284 + $0x28] sm:$0xf]
      %v402 = vld [vmem:[%s284 + $0x2c] sm:$0xf]
      %v403 = vld [vmem:[%s284 + $0x30] sm:$0xf]
      %v404 = vld [vmem:[%s284 + $0x34] sm:$0xf]
      %v405 = vld [vmem:[%s284 + $0x38] sm:$0xf]
      %v406 = vld [vmem:[%s284 + $0x3c] sm:$0xf]
      %v423 = vunpack.c.l.b16 %v391
      %v424 = vunpack.c.l.b16 %v392
      %v425 = vunpack.c.l.b16 %v393
      %v426 = vunpack.c.l.b16 %v394
      %v427 = vunpack.c.l.b16 %v395
      %v428 = vunpack.c.l.b16 %v396
      %v429 = vunpack.c.l.b16 %v397
      %v430 = vunpack.c.l.b16 %v398
      %v431 = vunpack.c.l.b16 %v399
      %v432 = vunpack.c.l.b16 %v400
      %v433 = vunpack.c.l.b16 %v401
      %v434 = vunpack.c.l.b16 %v402
      %v435 = vunpack.c.l.b16 %v403
      %v436 = vunpack.c.l.b16 %v404
      %v437 = vunpack.c.l.b16 %v405
      %v438 = vunpack.c.l.b16 %v406
      %v439 = vpack.c.b16 %v424, %v423
      %v440 = vpack.c.b16 %v426, %v425
      %v441 = vpack.c.b16 %v428, %v427
      %v442 = vpack.c.b16 %v430, %v429
      %v443 = vpack.c.b16 %v432, %v431
      %v444 = vpack.c.b16 %v434, %v433
      %v445 = vpack.c.b16 %v436, %v435
      %v446 = vpack.c.b16 %v438, %v437
      %455 = vmatprep.subr.bf16.mxu0 0
      %456 = vmatpush1.bf16.msra.mxu0 %v439
      %457 = vmatprep.subr.bf16.mxu0 0
      %458 = vmatpush1.bf16.msra.mxu0 %v440
      %459 = vmatprep.subr.bf16.mxu0 0
      %460 = vmatpush1.bf16.msra.mxu0 %v441
      %461 = vmatprep.subr.bf16.mxu0 0
      %462 = vmatpush1.bf16.msra.mxu0 %v442
      %463 = vmatprep.subr.bf16.mxu0 0
      %464 = vmatpush1.bf16.msra.mxu0 %v443
      %465 = vmatprep.subr.bf16.mxu0 0
      %466 = vmatpush1.bf16.msra.mxu0 %v444
      %467 = vmatprep.subr.bf16.mxu0 0
      %468 = vmatpush1.bf16.msra.mxu0 %v445
      %469 = vmatprep.subr.bf16.mxu0 0
      %470 = vmatpush1.bf16.msra.mxu0 %v446
      %471 = vmatprep.subr.bf16.mxu0 0
      %472 = vmatpush1.bf16.msra.mxu0 0
      %473 = vmatprep.subr.bf16.mxu0 0
      %474 = vmatpush1.bf16.msra.mxu0 0
      %475 = vmatprep.subr.bf16.mxu0 0
      %476 = vmatpush1.bf16.msra.mxu0 0
      %477 = vmatprep.subr.bf16.mxu0 0
      %478 = vmatpush1.bf16.msra.mxu0 0
      %479 = vmatprep.subr.bf16.mxu0 0
      %480 = vmatpush1.bf16.msra.mxu0 0
      %481 = vmatprep.subr.bf16.mxu0 0
      %482 = vmatpush1.bf16.msra.mxu0 0
      %483 = vmatprep.subr.bf16.mxu0 0
      %484 = vmatpush1.bf16.msra.mxu0 0
      %485 = vmatprep.subr.bf16.mxu0 0
      %486 = vmatpush1.bf16.msra.mxu0 0
      %487 = vmatprep.mubr.bf16.mxu0 0
      %488 = vmatmul.mubr.bf16.gmra.mrb[0].mxu0 %v390
      %v489 = vpop.f32.mrb[0].mxu0
      %v490 = vadd.f32 0.0, %v489
      %v491 = vpop.f32.mrb[0].mxu0
      %v492 = vpop.f32.mrb[0].mxu0
      %v493 = vadd.f32 0.0, %v492
      %v494 = vpop.f32.mrb[0].mxu0
      %495 = vdwg.mxu0
      %v496 = vadd.f32 %v388, %v490
      %v497 = vadd.f32 %v389, %v493
      %498 = vst [vmem:[#allocation2] sm:$0xff] %v496
      %499 = vst [vmem:[#allocation2 + $0x8] sm:$0xff] %v497
      %p500 = scmp.eq.s32.totalorder %s21, 3
      %p501 = pnand %p500, %p295
      %p502 = pneg %p501
      // Predicated region
      $region41: #{agent_forward.5} parent=35 // pred_check
        _
      $region42: #{agent_forward.5} parent=35 // pred_check_branch
        %504 = sbr.rel (%p501) target = $region44
      $region43: #{agent_forward.5} parent=35 // pred_region
        %v505 = vld [vmem:[#allocation2] sm:$0xff]
        %v506 = vld [vmem:[#allocation2 + $0x8] sm:$0xff]
        %v507 = vld [vmem:[%s288] sm:$0x1]
        %v509 = vlaneseq
        %v510 = vshrl.u32 %v509, 7
        %v511 = vsub.s32 0, %v510
        %v512 = vrot.slane %v507, %v511
        %v514 = vadd.f32 %v505, %v512
        %v515 = vadd.f32 %v506, %v512
        %516 = vst [vmem:[%s292] sm:$0xff] %v514
        %517 = vst [vmem:[%s292 + $0x8] sm:$0xff] %v515
      $region44: #{agent_forward.5} parent=35 // pred_fallthru
        _
      %p518 = scmp.lt.s32.totalorder %s20, 0
      %s519 = scalar_select %p518, %s20, 0
      %s520 = smul.addr %s519, 8
      %s521 = scalar_lea.vmem %s4, %s520
      // Predicated region
      $region45: #{agent_forward.5} parent=35 // pred_check
        %p522 = pneg %p160
      $region46: #{agent_forward.5} parent=35 // pred_check_branch
        %524 = sbr.rel (%p522) target = $region48
      $region47: #{agent_forward.5} parent=35 // pred_region
        _
      $region48: #{agent_forward.5} parent=35 // pred_fallthru
        _
      // Predicated region
      $region49: #{agent_forward.5} parent=35 // pred_check
        %p525 = pneg %p160
      $region50: #{agent_forward.5} parent=35 // pred_check_branch
        %527 = sbr.rel (%p525) target = $region52
      $region51: #{agent_forward.5} parent=35 // pred_region
        %p528 = scmp.lt.s32.totalorder %s20, 0
        %s529 = scalar_select %p528, %s20, 0
        %s530 = smul.addr %s529, 8
        %s531 = scalar_lea.vmem %s4, %s530
      $region52: #{agent_forward.5} parent=35 // pred_fallthru
        _
    $region36: #{agent_forward.5} parent=5 // pred_fallthru
      _
    %p532 = scmp.le.s32.totalorder 2, %s10
    // Predicated region
    $region53: #{agent_forward.5} parent=5 // pred_check
      %p533 = pneg %p532
    $region54: #{agent_forward.5} parent=5 // pred_check_branch
      %535 = sbr.rel (%p533) target = $region56
    $region55: #{agent_forward.5} parent=5 // pred_region
      %s536 = ssub.s32 %s10, 2
    $region56: #{agent_forward.5} parent=5 // pred_fallthru
      _
  $region6: #{agent_forward.5} parent=0 // loop_footer
    %s14 = sadd.s32 1, %s10
  $region7: #{agent_forward.5} parent=0 // loop_footer_branch
    %9 = sbr.rel target = $region3
  $region8: #{agent_forward.5} parent=0 // loop_exit
    _

// kernel: agent_forward.4
$region0: #{agent_forward.4}
  #allocation0 [shape = 'u32[]', space=smem, size = 0x4, offset = 0x4, fixed_abs, tag = 'smem constant byte address 0x4 - core index']
  #allocation1 [shape = 'u32[144,128]{1,0:T(1,128)}', space=vmem, size = 0x12000, scoped, tag = 'internal scratch']
  #allocation2 [shape = 'f32[16,128]{1,0:T(8,128)}', space=vmem, size = 0x2000, scoped, tag = 'scratch operand']
  %s0 = inlined_call_operand.vmem [shape: f32[4,16,16], index: 0, kind: input, shape index: {}]
  %s1 = inlined_call_operand.vmem [shape: f32[16,128], index: 1, kind: input, shape index: {}]
  %s2 = inlined_call_operand.vmem [shape: bf16[4,128,128], index: 2, kind: input, shape index: {}]
  %s3 = inlined_call_operand.vmem [shape: f32[1,128], index: 3, kind: input, shape index: {}]
  %s4 = inlined_call_operand.vmem [shape: f32[16,128], index: 4, kind: output, shape index: {}]
  %s5 = sld [smem:[#allocation0]]
  $region57: #{agent_forward.4} parent=0
    _
  %s7 = ssub.s32 1, %s5
  %s8 = scalar_select 0, %s7, %s5
  loop: start=0, step=1, limit=6
  $region2: #{agent_forward.4} parent=0 // loop_pre_header
    _
  $region3: #{agent_forward.4} parent=0 // loop_header
    %s10 = sphi 0, %s14
    %p11 = scmp.ge.s32.totalorder %s10, 6
    %s17 = sphi 0, %s36
    %s18 = sphi 0, %s32
    %s19 = sphi 0, %s28
    %s20 = sphi 0, %s17
    %s21 = sphi 0, %s18
    %s22 = sphi 0, %s19
    %s23 = sphi 0, %s20
    %s24 = sphi 0, %s21
    %s25 = sphi 0, %s22
    %s39 = sphi 0, %s41
    %s42 = sphi 0, %s39
    %s43 = sphi 0, %s42
    %s59 = sphi 0, %s43
    %s65 = sphi 0, %s67
    %s68 = sphi 0, %s65
    %s69 = sphi 0, %s68
    %s85 = sphi 0, %s69
    %s95 = sphi 0, %s97
    %s98 = sphi 0, %s95
    %s99 = sphi 0, %s98
    %s115 = sphi 0, %s99
    %s121 = sphi 0, %s123
    %s124 = sphi 0, %s121
    %s125 = sphi 0, %s124
    %s141 = sphi 0, %s125
    %s147 = sphi 0, %s149
    %s150 = sphi 0, %s147
    %s151 = sphi 0, %s150
    %s167 = sphi 0, %s151
  $region4: #{agent_forward.4} parent=0 // loop_header_branch
    %13 = sbr.rel (%p11) target = $region8
  $region5: #{agent_forward.4} parent=0 // loop_body
    %s15 = ssub.s32 %s10, 1
    %s16 = ssub.s32 %s10, 2
    %s26 = sadd.s32 1, %s19
    %p27 = scmp.ge.s32.totalorder %s26, 1
    %s28 = scalar_select %p27, 0, %s26
    %s29 = sadd.s32 1, %s18
    %s30 = scalar_select %p27, %s29, %s18
    %p31 = scmp.ge.s32.totalorder %s30, 4
    %s32 = scalar_select %p31, 0, %s30
    %s33 = sadd.s32 1, %s17
    %s34 = scalar_select %p31, %s33, %s17
    %p35 = scmp.ge.s32.totalorder %s34, 1
    %s36 = scalar_select %p35, 0, %s34
    %s37 = ssub.s32 %s18, %s32
    %p38 = scmp.eq.s32.totalorder %s37, 0
    %s40 = sadd.s32 %s39, 1
    %s41 = scalar_select %p38, %s39, %s40
    %p44 = pneg %p38
    %p45 = scmp.eq.s32.totalorder %s10, 3
    %p46 = por %p44, %p45
    %p47 = scmp.ne.s32.totalorder %s39, %s42
    %p48 = scmp.eq.s32.totalorder %s10, 0
    %p49 = por %p47, %p48
    %p50 = scmp.ne.s32.totalorder %s39, %s42
    %p51 = scmp.eq.s32.totalorder %s15, 3
    %p52 = por %p50, %p51
    %p53 = scmp.ne.s32.totalorder %s42, %s43
    %p54 = scmp.eq.s32.totalorder %s15, 0
    %p55 = por %p53, %p54
    %p56 = scmp.ne.s32.totalorder %s42, %s43
    %p57 = scmp.eq.s32.totalorder %s16, 3
    %p58 = por %p56, %p57
    %p60 = scmp.ne.s32.totalorder %s43, %s59
    %p61 = scmp.eq.s32.totalorder %s16, 0
    %p62 = por %p60, %p61
    %s63 = ssub.s32 %s19, %s28
    %p64 = scmp.eq.s32.totalorder %s63, 0
    %s66 = sadd.s32 %s65, 1
    %s67 = scalar_select %p64, %s65, %s66
    %p70 = pneg %p64
    %p71 = scmp.eq.s32.totalorder %s10, 3
    %p72 = por %p70, %p71
    %p73 = scmp.ne.s32.totalorder %s65, %s68
    %p74 = scmp.eq.s32.totalorder %s10, 0
    %p75 = por %p73, %p74
    %p76 = scmp.ne.s32.totalorder %s65, %s68
    %p77 = scmp.eq.s32.totalorder %s15, 3
    %p78 = por %p76, %p77
    %p79 = scmp.ne.s32.totalorder %s68, %s69
    %p80 = scmp.eq.s32.totalorder %s15, 0
    %p81 = por %p79, %p80
    %p82 = scmp.ne.s32.totalorder %s68, %s69
    %p83 = scmp.eq.s32.totalorder %s16, 3
    %p84 = por %p82, %p83
    %p86 = scmp.ne.s32.totalorder %s69, %s85
    %p87 = scmp.eq.s32.totalorder %s16, 0
    %p88 = por %p86, %p87
    %s89 = ssub.s32 %s18, %s32
    %s90 = ssub.s32 %s19, %s28
    %s91 = sor.u32 %s89, %s90
    %s92 = ssub.s32 %s17, %s36
    %s93 = sor.u32 %s91, %s92
    %p94 = scmp.eq.s32.totalorder %s93, 0
    %s96 = sadd.s32 %s95, 1
    %s97 = scalar_select %p94, %s95, %s96
    %p100 = pneg %p94
    %p101 = scmp.eq.s32.totalorder %s10, 3
    %p102 = por %p100, %p101
    %p103 = scmp.ne.s32.totalorder %s95, %s98
    %p104 = scmp.eq.s32.totalorder %s10, 0
    %p105 = por %p103, %p104
    %p106 = scmp.ne.s32.totalorder %s95, %s98
    %p107 = scmp.eq.s32.totalorder %s15, 3
    %p108 = por %p106, %p107
    %p109 = scmp.ne.s32.totalorder %s98, %s99
    %p110 = scmp.eq.s32.totalorder %s15, 0
    %p111 = por %p109, %p110
    %p112 = scmp.ne.s32.totalorder %s98, %s99
    %p113 = scmp.eq.s32.totalorder %s16, 3
    %p114 = por %p112, %p113
    %p116 = scmp.ne.s32.totalorder %s99, %s115
    %p117 = scmp.eq.s32.totalorder %s16, 0
    %p118 = por %p116, %p117
    %s119 = ssub.s32 %s17, %s36
    %p120 = scmp.eq.s32.totalorder %s119, 0
    %s122 = sadd.s32 %s121, 1
    %s123 = scalar_select %p120, %s121, %s122
    %p126 = pneg %p120
    %p127 = scmp.eq.s32.totalorder %s10, 3
    %p128 = por %p126, %p127
    %p129 = scmp.ne.s32.totalorder %s121, %s124
    %p130 = scmp.eq.s32.totalorder %s10, 0
    %p131 = por %p129, %p130
    %p132 = scmp.ne.s32.totalorder %s121, %s124
    %p133 = scmp.eq.s32.totalorder %s15, 3
    %p134 = por %p132, %p133
    %p135 = scmp.ne.s32.totalorder %s124, %s125
    %p136 = scmp.eq.s32.totalorder %s15, 0
    %p137 = por %p135, %p136
    %p138 = scmp.ne.s32.totalorder %s124, %s125
    %p139 = scmp.eq.s32.totalorder %s16, 3
    %p140 = por %p138, %p139
    %p142 = scmp.ne.s32.totalorder %s125, %s141
    %p143 = scmp.eq.s32.totalorder %s16, 0
    %p144 = por %p142, %p143
    %s145 = ssub.s32 %s17, %s36
    %p146 = scmp.eq.s32.totalorder %s145, 0
    %s148 = sadd.s32 %s147, 1
    %s149 = scalar_select %p146, %s147, %s148
    %p152 = pneg %p146
    %p153 = scmp.eq.s32.totalorder %s10, 3
    %p154 = por %p152, %p153
    %p155 = scmp.ne.s32.totalorder %s147, %s150
    %p156 = scmp.eq.s32.totalorder %s10, 0
    %p157 = por %p155, %p156
    %p158 = scmp.ne.s32.totalorder %s147, %s150
    %p159 = scmp.eq.s32.totalorder %s15, 3
    %p160 = por %p158, %p159
    %p161 = scmp.ne.s32.totalorder %s150, %s151
    %p162 = scmp.eq.s32.totalorder %s15, 0
    %p163 = por %p161, %p162
    %p164 = scmp.ne.s32.totalorder %s150, %s151
    %p165 = scmp.eq.s32.totalorder %s16, 3
    %p166 = por %p164, %p165
    %p168 = scmp.ne.s32.totalorder %s151, %s167
    %p169 = scmp.eq.s32.totalorder %s16, 0
    %p170 = por %p168, %p169
    %p171 = scmp.le.s32.totalorder 1, %s10
    %p172 = scmp.lt.s32.totalorder %s10, 5
    %p173 = pnand %p171, %p172
    %p174 = pneg %p173
    // Predicated region
    $region9: #{agent_forward.4} parent=5 // pred_check
      _
    $region10: #{agent_forward.4} parent=5 // pred_check_branch
      %176 = sbr.rel (%p173) target = $region12
    $region11: #{agent_forward.4} parent=5 // pred_region
      %s177 = ssub.s32 %s10, 1
      // Predicated region
      $region13: #{agent_forward.4} parent=11 // pred_check
        %p178 = pneg %p81
      $region14: #{agent_forward.4} parent=11 // pred_check_branch
        %180 = sbr.rel (%p178) target = $region16
      $region15: #{agent_forward.4} parent=11 // pred_region
        %p181 = scmp.lt.s32.totalorder %s22, 0
        %s182 = scalar_select %p181, %s22, 0
        %s183 = smul.addr %s182, 8
        %s184 = scalar_lea.vmem %s1, %s183
      $region16: #{agent_forward.4} parent=11 // pred_fallthru
        _
      // Predicated region
      $region17: #{agent_forward.4} parent=11 // pred_check
        %p185 = pneg %p137
      $region18: #{agent_forward.4} parent=11 // pred_check_branch
        %187 = sbr.rel (%p185) target = $region20
      $region19: #{agent_forward.4} parent=11 // pred_region
        %p188 = scmp.lt.s32.totalorder %s20, 0
        %s189 = scalar_select %p188, %s20, 0
        %s190 = scalar_lea.vmem %s3, %s189
      $region20: #{agent_forward.4} parent=11 // pred_fallthru
        _
    $region12: #{agent_forward.4} parent=5 // pred_fallthru
      _
    %p191 = scmp.lt.s32.totalorder %s10, 4
    // Predicated region
    $region21: #{agent_forward.4} parent=5 // pred_check
      %p192 = pneg %p191
    $region22: #{agent_forward.4} parent=5 // pred_check_branch
      %194 = sbr.rel (%p192) target = $region24
    $region23: #{agent_forward.4} parent=5 // pred_region
      // Predicated region
      $region25: #{agent_forward.4} parent=23 // pred_check
        %p195 = pneg %p49
      $region26: #{agent_forward.4} parent=23 // pred_check_branch
        %197 = sbr.rel (%p195) target = $region28
      $region27: #{agent_forward.4} parent=23 // pred_region
        %p198 = scmp.lt.s32.totalorder %s18, 3
        %s199 = scalar_select %p198, %s18, 3
        %s200 = smul.addr %s199, 2
        %s201 = smul.addr %s200, 8
        %s202 = scalar_lea.vmem %s0, %s201
      $region28: #{agent_forward.4} parent=23 // pred_fallthru
        _
      // Predicated region
      $region29: #{agent_forward.4} parent=23 // pred_check
        %p203 = pneg %p105
      $region30: #{agent_forward.4} parent=23 // pred_check_branch
        %205 = sbr.rel (%p203) target = $region32
      $region31: #{agent_forward.4} parent=23 // pred_region
        %s206 = smul.u32 16, %s19
        %p207 = scmp.lt.s32.totalorder %s18, 3
        %s208 = scalar_select %p207, %s18, 3
        %p209 = scmp.lt.s32.totalorder %s206, 15
        %s210 = scalar_select %p209, %s206, 15
        %p211 = scmp.lt.s32.totalorder %s17, 0
        %s212 = scalar_select %p211, %s17, 0
        %s213 = sadd.s32 %s212, %s210
        %s214 = smul.addr %s208, 16
        %s215 = sadd.s32 %s213, %s214
        %s216 = smul.addr %s215, 4
        %s217 = scalar_lea.vmem %s2, %s216
        %s218 = smul.u32 16, %s19
      $region32: #{agent_forward.4} parent=23 // pred_fallthru
        _
    $region24: #{agent_forward.4} parent=5 // pred_fallthru
      _
    %p219 = scmp.le.s32.totalorder 1, %s10
    %p220 = scmp.lt.s32.totalorder %s10, 5
    %p221 = pnand %p219, %p220
    %p222 = pneg %p221
    // Predicated region
    $region33: #{agent_forward.4} parent=5 // pred_check
      _
    $region34: #{agent_forward.4} parent=5 // pred_check_branch
      %224 = sbr.rel (%p221) target = $region36
    $region35: #{agent_forward.4} parent=5 // pred_region
      %s225 = ssub.s32 %s10, 1
      %p226 = scmp.lt.s32.totalorder %s21, 3
      %s227 = scalar_select %p226, %s21, 3
      %s228 = smul.addr %s227, 2
      %s229 = smul.addr %s228, 8
      %s230 = scalar_lea.vmem %s0, %s229
      %p231 = pneg %p55
      %p232 = pneg %p52
      %p233 = scmp.lt.s32.totalorder %s22, 0
      %s234 = scalar_select %p233, %s22, 0
      %s235 = smul.addr %s234, 8
      %s236 = scalar_lea.vmem %s1, %s235
      %p237 = pneg %p81
      %p238 = pneg %p78
      %s239 = smul.u32 16, %s22
      %p240 = scmp.lt.s32.totalorder %s21, 3
      %s241 = scalar_select %p240, %s21, 3
      %p242 = scmp.lt.s32.totalorder %s239, 15
      %s243 = scalar_select %p242, %s239, 15
      %p244 = scmp.lt.s32.totalorder %s20, 0
      %s245 = scalar_select %p244, %s20, 0
      %s246 = sadd.s32 %s245, %s243
      %s247 = smul.addr %s241, 16
      %s248 = sadd.s32 %s246, %s247
      %s249 = smul.addr %s248, 4
      %s250 = scalar_lea.vmem %s2, %s249
      %p251 = pneg %p111
      %p252 = pneg %p108
      %p253 = scmp.lt.s32.totalorder %s20, 0
      %s254 = scalar_select %p253, %s20, 0
      %s255 = scalar_lea.vmem %s3, %s254
      %p256 = pneg %p137
      %p257 = pneg %p134
      %p258 = pneg %p163
      %p259 = pneg %p160
      %p260 = scmp.lt.s32.totalorder %s20, 0
      %s261 = scalar_select %p260, %s20, 0
      %s262 = smul.addr %s261, 8
      %s263 = scalar_lea.vmem %s4, %s262
      %p264 = scmp.lt.s32.totalorder %s21, 3
      %s265 = scalar_select %p264, %s21, 3
      %s266 = smul.addr %s265, 2
      %s267 = smul.addr %s266, 8
      %s268 = scalar_lea.vmem %s0, %s267
      %p269 = scmp.lt.s32.totalorder %s22, 0
      %s270 = scalar_select %p269, %s22, 0
      %s271 = smul.addr %s270, 8
      %s272 = scalar_lea.vmem %s1, %s271
      %s273 = smul.u32 16, %s22
      %p274 = scmp.lt.s32.totalorder %s21, 3
      %s275 = scalar_select %p274, %s21, 3
      %p276 = scmp.lt.s32.totalorder %s273, 15
      %s277 = scalar_select %p276, %s273, 15
      %p278 = scmp.lt.s32.totalorder %s20, 0
      %s279 = scalar_select %p278, %s20, 0
      %s280 = sadd.s32 %s279, %s277
      %s281 = smul.addr %s275, 16
      %s282 = sadd.s32 %s280, %s281
      %s283 = smul.addr %s282, 4
      %s284 = scalar_lea.vmem %s2, %s283
      %s285 = smul.u32 16, %s22
      %p286 = scmp.lt.s32.totalorder %s20, 0
      %s287 = scalar_select %p286, %s20, 0
      %s288 = scalar_lea.vmem %s3, %s287
      %p289 = scmp.lt.s32.totalorder %s20, 0
      %s290 = scalar_select %p289, %s20, 0
      %s291 = smul.addr %s290, 8
      %s292 = scalar_lea.vmem %s4, %s291
      %p294 = scmp.eq.s32.totalorder %s21, 0
      %p295 = scmp.eq.s32.totalorder %s22, 0
      %p296 = pnand %p294, %p295
      %p297 = pneg %p296
      // Predicated region
      $region37: #{agent_forward.4} parent=35 // pred_check
        _
      $region38: #{agent_forward.4} parent=35 // pred_check_branch
        %299 = sbr.rel (%p296) target = $region40
      $region39: #{agent_forward.4} parent=35 // pred_region
        %300 = vst [vmem:[#allocation2] sm:$0xff] 0.0
        %301 = vst [vmem:[#allocation2 + $0x8] sm:$0xff] 0.0
      $region40: #{agent_forward.4} parent=35 // pred_fallthru
        _
      %v302 = vld [vmem:[%s268] sm:$0xff]
      %v303 = vld [vmem:[%s268 + $0x8] sm:$0xff]
      %v304 = vld [vmem:[%s272] sm:$0xff]
      %v305 = vld [vmem:[%s272 + $0x8] sm:$0xff]
      %vm306 = vcmask 130048
      %v308 = vsel %vm306, %v302, 0
      %v311 = vsel %vm306, %v303, 0
      %313 = vmatprep.subr.mxu0 0.0
      %314 = vmatpush1.msra.mxu0 %v304
      %315 = vmatprep.subr.mxu0 0.0
      %316 = vmatpush1.msra.mxu0 %v305
      %317 = vmatprep.subr.mxu0 0.0
      %318 = vmatpush1.msra.mxu0 0.0
      %319 = vmatprep.subr.mxu0 0.0
      %320 = vmatpush1.msra.mxu0 0.0
      %321 = vmatprep.subr.mxu0 0.0
      %322 = vmatpush1.msra.mxu0 0.0
      %323 = vmatprep.subr.mxu0 0.0
      %324 = vmatpush1.msra.mxu0 0.0
      %325 = vmatprep.subr.mxu0 0.0
      %326 = vmatpush1.msra.mxu0 0.0
      %327 = vmatprep.subr.mxu0 0.0
      %328 = vmatpush1.msra.mxu0 0.0
      %329 = vmatprep.subr.mxu0 0.0
      %330 = vmatpush1.msra.mxu0 0.0
      %331 = vmatprep.subr.mxu0 0.0
      %332 = vmatpush1.msra.mxu0 0.0
      %333 = vmatprep.subr.mxu0 0.0
      %334 = vmatpush1.msra.mxu0 0.0
      %335 = vmatprep.subr.mxu0 0.0
      %336 = vmatpush1.msra.mxu0 0.0
      %337 = vmatprep.subr.mxu0 0.0
      %338 = vmatpush1.msra.mxu0 0.0
      %339 = vmatprep.subr.mxu0 0.0
      %340 = vmatpush1.msra.mxu0 0.0
      %341 = vmatprep.subr.mxu0 0.0
      %342 = vmatpush1.msra.mxu0 0.0
      %343 = vmatprep.subr.mxu0 0.0
      %344 = vmatpush1.msra.mxu0 0.0
      %345 = vmatprep.subr.mxu0 0.0
      %346 = vmatpush1.msra.mxu0 0.0
      %347 = vmatprep.subr.mxu0 0.0
      %348 = vmatpush1.msra.mxu0 0.0
      %349 = vmatprep.subr.mxu0 0.0
      %350 = vmatpush1.msra.mxu0 0.0
      %351 = vmatprep.subr.mxu0 0.0
      %352 = vmatpush1.msra.mxu0 0.0
      %353 = vmatprep.subr.mxu0 0.0
      %354 = vmatpush1.msra.mxu0 0.0
      %355 = vmatprep.subr.mxu0 0.0
      %356 = vmatpush1.msra.mxu0 0.0
      %357 = vmatprep.subr.mxu0 0.0
      %358 = vmatpush1.msra.mxu0 0.0
      %359 = vmatprep.subr.mxu0 0.0
      %360 = vmatpush1.msra.mxu0 0.0
      %361 = vmatprep.subr.mxu0 0.0
      %362 = vmatpush1.msra.mxu0 0.0
      %363 = vmatprep.subr.mxu0 0.0
      %364 = vmatpush1.msra.mxu0 0.0
      %365 = vmatprep.subr.mxu0 0.0
      %366 = vmatpush1.msra.mxu0 0.0
      %367 = vmatprep.subr.mxu0 0.0
      %368 = vmatpush1.msra.mxu0 0.0
      %369 = vmatprep.subr.mxu0 0.0
      %370 = vmatpush1.msra.mxu0 0.0
      %371 = vmatprep.subr.mxu0 0.0
      %372 = vmatpush1.msra.mxu0 0.0
      %373 = vmatprep.subr.mxu0 0.0
      %374 = vmatpush1.msra.mxu0 0.0
      %375 = vmatprep.subr.mxu0 0.0
      %376 = vmatpush1.msra.mxu0 0.0
      %377 = vmatprep.mubr.f32.mxu0 0.0
      %378 = vmatmul.mubr.f32.gmra.mrb[0].mxu0 %v308
      %v379 = vpop.f32.mrb[0].mxu0
      %v380 = vadd.f32 0.0, %v379
      %v381 = vpop.f32.mrb[0].mxu0
      %382 = vmatprep.mubr.f32.mxu0 0.0
      %383 = vmatmul.mubr.f32.gmra.mrb[0].mxu0 %v311
      %v384 = vpop.f32.mrb[0].mxu0
      %v385 = vadd.f32 0.0, %v384
      %v386 = vpop.f32.mrb[0].mxu0
      %387 = vdwg.mxu0
      %v388 = vld [vmem:[#allocation2] sm:$0xff]
      %v389 = vld [vmem:[#allocation2 + $0x8] sm:$0xff]
      %v390 = vpack.c.bf16 %v385, %v380
      %v391 = vld [vmem:[%s284] sm:$0xf]
      %v392 = vld [vmem:[%s284 + $0x4] sm:$0xf]
      %v393 = vld [vmem:[%s284 + $0x8] sm:$0xf]
      %v394 = vld [vmem:[%s284 + $0xc] sm:$0xf]
      %v395 = vld [vmem:[%s284 + $0x10] sm:$0xf]
      %v396 = vld [vmem:[%s284 + $0x14] sm:$0xf]
      %v397 = vld [vmem:[%s284 + $0x18] sm:$0xf]
      %v398 = vld [vmem:[%s284 + $0x1c] sm:$0xf]
      %v399 = vld [vmem:[%s284 + $0x20] sm:$0xf]
      %v400 = vld [vmem:[%s284 + $0x24] sm:$0xf]
      %v401 = vld [vmem:[%s284 + $0x28] sm:$0xf]
      %v402 = vld [vmem:[%s284 + $0x2c] sm:$0xf]
      %v403 = vld [vmem:[%s284 + $0x30] sm:$0xf]
      %v404 = vld [vmem:[%s284 + $0x34] sm:$0xf]
      %v405 = vld [vmem:[%s284 + $0x38] sm:$0xf]
      %v406 = vld [vmem:[%s284 + $0x3c] sm:$0xf]
      %v423 = vunpack.c.l.b16 %v391
      %v424 = vunpack.c.l.b16 %v392
      %v425 = vunpack.c.l.b16 %v393
      %v426 = vunpack.c.l.b16 %v394
      %v427 = vunpack.c.l.b16 %v395
      %v428 = vunpack.c.l.b16 %v396
      %v429 = vunpack.c.l.b16 %v397
      %v430 = vunpack.c.l.b16 %v398
      %v431 = vunpack.c.l.b16 %v399
      %v432 = vunpack.c.l.b16 %v400
      %v433 = vunpack.c.l.b16 %v401
      %v434 = vunpack.c.l.b16 %v402
      %v435 = vunpack.c.l.b16 %v403
      %v436 = vunpack.c.l.b16 %v404
      %v437 = vunpack.c.l.b16 %v405
      %v438 = vunpack.c.l.b16 %v406
      %v439 = vpack.c.b16 %v424, %v423
      %v440 = vpack.c.b16 %v426, %v425
      %v441 = vpack.c.b16 %v428, %v427
      %v442 = vpack.c.b16 %v430, %v429
      %v443 = vpack.c.b16 %v432, %v431
      %v444 = vpack.c.b16 %v434, %v433
      %v445 = vpack.c.b16 %v436, %v435
      %v446 = vpack.c.b16 %v438, %v437
      %455 = vmatprep.subr.bf16.mxu0 0
      %456 = vmatpush1.bf16.msra.mxu0 %v439
      %457 = vmatprep.subr.bf16.mxu0 0
      %458 = vmatpush1.bf16.msra.mxu0 %v440
      %459 = vmatprep.subr.bf16.mxu0 0
      %460 = vmatpush1.bf16.msra.mxu0 %v441
      %461 = vmatprep.subr.bf16.mxu0 0
      %462 = vmatpush1.bf16.msra.mxu0 %v442
      %463 = vmatprep.subr.bf16.mxu0 0
      %464 = vmatpush1.bf16.msra.mxu0 %v443
      %465 = vmatprep.subr.bf16.mxu0 0
      %466 = vmatpush1.bf16.msra.mxu0 %v444
      %467 = vmatprep.subr.bf16.mxu0 0
      %468 = vmatpush1.bf16.msra.mxu0 %v445
      %469 = vmatprep.subr.bf16.mxu0 0
      %470 = vmatpush1.bf16.msra.mxu0 %v446
      %471 = vmatprep.subr.bf16.mxu0 0
      %472 = vmatpush1.bf16.msra.mxu0 0
      %473 = vmatprep.subr.bf16.mxu0 0
      %474 = vmatpush1.bf16.msra.mxu0 0
      %475 = vmatprep.subr.bf16.mxu0 0
      %476 = vmatpush1.bf16.msra.mxu0 0
      %477 = vmatprep.subr.bf16.mxu0 0
      %478 = vmatpush1.bf16.msra.mxu0 0
      %479 = vmatprep.subr.bf16.mxu0 0
      %480 = vmatpush1.bf16.msra.mxu0 0
      %481 = vmatprep.subr.bf16.mxu0 0
      %482 = vmatpush1.bf16.msra.mxu0 0
      %483 = vmatprep.subr.bf16.mxu0 0
      %484 = vmatpush1.bf16.msra.mxu0 0
      %485 = vmatprep.subr.bf16.mxu0 0
      %486 = vmatpush1.bf16.msra.mxu0 0
      %487 = vmatprep.mubr.bf16.mxu0 0
      %488 = vmatmul.mubr.bf16.gmra.mrb[0].mxu0 %v390
      %v489 = vpop.f32.mrb[0].mxu0
      %v490 = vadd.f32 0.0, %v489
      %v491 = vpop.f32.mrb[0].mxu0
      %v492 = vpop.f32.mrb[0].mxu0
      %v493 = vadd.f32 0.0, %v492
      %v494 = vpop.f32.mrb[0].mxu0
      %495 = vdwg.mxu0
      %v496 = vadd.f32 %v388, %v490
      %v497 = vadd.f32 %v389, %v493
      %498 = vst [vmem:[#allocation2] sm:$0xff] %v496
      %499 = vst [vmem:[#allocation2 + $0x8] sm:$0xff] %v497
      %p500 = scmp.eq.s32.totalorder %s21, 3
      %p501 = pnand %p500, %p295
      %p502 = pneg %p501
      // Predicated region
      $region41: #{agent_forward.4} parent=35 // pred_check
        _
      $region42: #{agent_forward.4} parent=35 // pred_check_branch
        %504 = sbr.rel (%p501) target = $region44
      $region43: #{agent_forward.4} parent=35 // pred_region
        %v505 = vld [vmem:[#allocation2] sm:$0xff]
        %v506 = vld [vmem:[#allocation2 + $0x8] sm:$0xff]
        %v507 = vld [vmem:[%s288] sm:$0x1]
        %v509 = vlaneseq
        %v510 = vshrl.u32 %v509, 7
        %v511 = vsub.s32 0, %v510
        %v512 = vrot.slane %v507, %v511
        %v514 = vadd.f32 %v505, %v512
        %v515 = vadd.f32 %v506, %v512
        %v516 = vmax.f32 %v514, 0.0
        %v517 = vmax.f32 %v515, 0.0
        %518 = vst [vmem:[%s292] sm:$0xff] %v516
        %519 = vst [vmem:[%s292 + $0x8] sm:$0xff] %v517
      $region44: #{agent_forward.4} parent=35 // pred_fallthru
        _
      %p520 = scmp.lt.s32.totalorder %s20, 0
      %s521 = scalar_select %p520, %s20, 0
      %s522 = smul.addr %s521, 8
      %s523 = scalar_lea.vmem %s4, %s522
      // Predicated region
      $region45: #{agent_forward.4} parent=35 // pred_check
        %p524 = pneg %p160
      $region46: #{agent_forward.4} parent=35 // pred_check_branch
        %526 = sbr.rel (%p524) target = $region48
      $region47: #{agent_forward.4} parent=35 // pred_region
        _
      $region48: #{agent_forward.4} parent=35 // pred_fallthru
        _
      // Predicated region
      $region49: #{agent_forward.4} parent=35 // pred_check
        %p527 = pneg %p160
      $region50: #{agent_forward.4} parent=35 // pred_check_branch
        %529 = sbr.rel (%p527) target = $region52
      $region51: #{agent_forward.4} parent=35 // pred_region
        %p530 = scmp.lt.s32.totalorder %s20, 0
        %s531 = scalar_select %p530, %s20, 0
        %s532 = smul.addr %s531, 8
        %s533 = scalar_lea.vmem %s4, %s532
      $region52: #{agent_forward.4} parent=35 // pred_fallthru
        _
    $region36: #{agent_forward.4} parent=5 // pred_fallthru
      _
    %p534 = scmp.le.s32.totalorder 2, %s10
    // Predicated region
    $region53: #{agent_forward.4} parent=5 // pred_check
      %p535 = pneg %p534
    $region54: #{agent_forward.4} parent=5 // pred_check_branch
      %537 = sbr.rel (%p535) target = $region56
    $region55: #{agent_forward.4} parent=5 // pred_region
      %s538 = ssub.s32 %s10, 2
    $region56: #{agent_forward.4} parent=5 // pred_fallthru
      _
  $region6: #{agent_forward.4} parent=0 // loop_footer
    %s14 = sadd.s32 1, %s10
  $region7: #{agent_forward.4} parent=0 // loop_footer_branch
    %9 = sbr.rel target = $region3
  $region8: #{agent_forward.4} parent=0 // loop_exit
    _

// kernel: agent_forward.6
$region0: #{agent_forward.6}
  #allocation0 [shape = 'u32[]', space=smem, size = 0x4, offset = 0x4, fixed_abs, tag = 'smem constant byte address 0x4 - core index']
  #allocation1 [shape = 'u32[144,128]{1,0:T(1,128)}', space=vmem, size = 0x12000, scoped, tag = 'internal scratch']
  #allocation2 [shape = 'f32[16,128]{1,0:T(8,128)}', space=vmem, size = 0x2000, scoped, tag = 'scratch operand']
  %s0 = inlined_call_operand.vmem [shape: bf16[1,16,128], index: 0, kind: input, shape index: {}]
  %s1 = inlined_call_operand.vmem [shape: bf16[128,128], index: 1, kind: input, shape index: {}]
  %s2 = inlined_call_operand.vmem [shape: f32[1,128], index: 2, kind: input, shape index: {}]
  %s3 = inlined_call_operand.vmem [shape: bf16[16,128], index: 3, kind: output, shape index: {}]
  %s4 = sld [smem:[#allocation0]]
  $region30: #{agent_forward.6} parent=0
    _
  %s6 = ssub.s32 1, %s4
  %s7 = scalar_select 0, %s6, %s4
  // Predicated region
  $region2: #{agent_forward.6} parent=0 // pred_check
    _
  $region3: #{agent_forward.6} parent=0 // pred_check_branch
    %9 = sbr.rel (0) target = $region5
  $region4: #{agent_forward.6} parent=0 // pred_region
    _
  $region5: #{agent_forward.6} parent=0 // pred_fallthru
    _
  // Predicated region
  $region6: #{agent_forward.6} parent=0 // pred_check
    _
  $region7: #{agent_forward.6} parent=0 // pred_check_branch
    %11 = sbr.rel (0) target = $region9
  $region8: #{agent_forward.6} parent=0 // pred_region
    _
  $region9: #{agent_forward.6} parent=0 // pred_fallthru
    _
  // Predicated region
  $region10: #{agent_forward.6} parent=0 // pred_check
    _
  $region11: #{agent_forward.6} parent=0 // pred_check_branch
    %13 = sbr.rel (0) target = $region13
  $region12: #{agent_forward.6} parent=0 // pred_region
    _
  $region13: #{agent_forward.6} parent=0 // pred_fallthru
    _
  %p15 = scmp.eq.s32.totalorder 0, 0
  // Predicated region
  $region14: #{agent_forward.6} parent=0 // pred_check
    %p16 = pneg %p15
  $region15: #{agent_forward.6} parent=0 // pred_check_branch
    %18 = sbr.rel (%p16) target = $region17
  $region16: #{agent_forward.6} parent=0 // pred_region
    %19 = vst [vmem:[#allocation2] sm:$0xff] 0.0
    %20 = vst [vmem:[#allocation2 + $0x8] sm:$0xff] 0.0
  $region17: #{agent_forward.6} parent=0 // pred_fallthru
    _
  %v21 = vld [vmem:[#allocation2] sm:$0xff]
  %v22 = vld [vmem:[#allocation2 + $0x8] sm:$0xff]
  %s23 = smul.u32 0, 2
  %s24 = smul.addr %s23, 4
  %s25 = scalar_lea.vmem %s0, %s24
  %v26 = vld [vmem:[%s25] sm:$0xf]
  %v27 = vld [vmem:[%s25 + $0x4] sm:$0xf]
  %v28 = vld [vmem:[%s1] sm:$0xf]
  %v29 = vld [vmem:[%s1 + $0x4] sm:$0xf]
  %v30 = vld [vmem:[%s1 + $0x8] sm:$0xf]
  %v31 = vld [vmem:[%s1 + $0xc] sm:$0xf]
  %v32 = vld [vmem:[%s1 + $0x10] sm:$0xf]
  %v33 = vld [vmem:[%s1 + $0x14] sm:$0xf]
  %v34 = vld [vmem:[%s1 + $0x18] sm:$0xf]
  %v35 = vld [vmem:[%s1 + $0x1c] sm:$0xf]
  %v36 = vld [vmem:[%s1 + $0x20] sm:$0xf]
  %v37 = vld [vmem:[%s1 + $0x24] sm:$0xf]
  %v38 = vld [vmem:[%s1 + $0x28] sm:$0xf]
  %v39 = vld [vmem:[%s1 + $0x2c] sm:$0xf]
  %v40 = vld [vmem:[%s1 + $0x30] sm:$0xf]
  %v41 = vld [vmem:[%s1 + $0x34] sm:$0xf]
  %v42 = vld [vmem:[%s1 + $0x38] sm:$0xf]
  %v43 = vld [vmem:[%s1 + $0x3c] sm:$0xf]
  %v46 = vunpack.c.l.b16 %v26
  %v47 = vunpack.c.l.b16 %v27
  %v48 = vpack.c.b16 %v47, %v46
  %v66 = vunpack.c.l.b16 %v28
  %v67 = vunpack.c.l.b16 %v29
  %v68 = vunpack.c.l.b16 %v30
  %v69 = vunpack.c.l.b16 %v31
  %v70 = vunpack.c.l.b16 %v32
  %v71 = vunpack.c.l.b16 %v33
  %v72 = vunpack.c.l.b16 %v34
  %v73 = vunpack.c.l.b16 %v35
  %v74 = vunpack.c.l.b16 %v36
  %v75 = vunpack.c.l.b16 %v37
  %v76 = vunpack.c.l.b16 %v38
  %v77 = vunpack.c.l.b16 %v39
  %v78 = vunpack.c.l.b16 %v40
  %v79 = vunpack.c.l.b16 %v41
  %v80 = vunpack.c.l.b16 %v42
  %v81 = vunpack.c.l.b16 %v43
  %v82 = vpack.c.b16 %v67, %v66
  %v83 = vpack.c.b16 %v69, %v68
  %v84 = vpack.c.b16 %v71, %v70
  %v85 = vpack.c.b16 %v73, %v72
  %v86 = vpack.c.b16 %v75, %v74
  %v87 = vpack.c.b16 %v77, %v76
  %v88 = vpack.c.b16 %v79, %v78
  %v89 = vpack.c.b16 %v81, %v80
  %98 = vmatprep.subr.bf16.mxu0 0
  %99 = vmatpush1.bf16.msra.mxu0 %v82
  %100 = vmatprep.subr.bf16.mxu0 0
  %101 = vmatpush1.bf16.msra.mxu0 %v83
  %102 = vmatprep.subr.bf16.mxu0 0
  %103 = vmatpush1.bf16.msra.mxu0 %v84
  %104 = vmatprep.subr.bf16.mxu0 0
  %105 = vmatpush1.bf16.msra.mxu0 %v85
  %106 = vmatprep.subr.bf16.mxu0 0
  %107 = vmatpush1.bf16.msra.mxu0 %v86
  %108 = vmatprep.subr.bf16.mxu0 0
  %109 = vmatpush1.bf16.msra.mxu0 %v87
  %110 = vmatprep.subr.bf16.mxu0 0
  %111 = vmatpush1.bf16.msra.mxu0 %v88
  %112 = vmatprep.subr.bf16.mxu0 0
  %113 = vmatpush1.bf16.msra.mxu0 %v89
  %114 = vmatprep.subr.bf16.mxu0 0
  %115 = vmatpush1.bf16.msra.mxu0 0
  %116 = vmatprep.subr.bf16.mxu0 0
  %117 = vmatpush1.bf16.msra.mxu0 0
  %118 = vmatprep.subr.bf16.mxu0 0
  %119 = vmatpush1.bf16.msra.mxu0 0
  %120 = vmatprep.subr.bf16.mxu0 0
  %121 = vmatpush1.bf16.msra.mxu0 0
  %122 = vmatprep.subr.bf16.mxu0 0
  %123 = vmatpush1.bf16.msra.mxu0 0
  %124 = vmatprep.subr.bf16.mxu0 0
  %125 = vmatpush1.bf16.msra.mxu0 0
  %126 = vmatprep.subr.bf16.mxu0 0
  %127 = vmatpush1.bf16.msra.mxu0 0
  %128 = vmatprep.subr.bf16.mxu0 0
  %129 = vmatpush1.bf16.msra.mxu0 0
  %130 = vmatprep.mubr.bf16.mxu0 0
  %131 = vmatmul.mubr.bf16.gmra.mrb[0].mxu0 %v48
  %v132 = vpop.f32.mrb[0].mxu0
  %v133 = vadd.f32 0.0, %v132
  %v134 = vpop.f32.mrb[0].mxu0
  %v135 = vpop.f32.mrb[0].mxu0
  %v136 = vadd.f32 0.0, %v135
  %v137 = vpop.f32.mrb[0].mxu0
  %138 = vdwg.mxu0
  %v139 = vadd.f32 %v21, %v133
  %v140 = vadd.f32 %v22, %v136
  %141 = vst [vmem:[#allocation2] sm:$0xff] %v139
  %142 = vst [vmem:[#allocation2 + $0x8] sm:$0xff] %v140
  // Predicated region
  $region18: #{agent_forward.6} parent=0 // pred_check
    %p143 = pneg %p15
  $region19: #{agent_forward.6} parent=0 // pred_check_branch
    %145 = sbr.rel (%p143) target = $region21
  $region20: #{agent_forward.6} parent=0 // pred_region
    %v146 = vld [vmem:[#allocation2] sm:$0xff]
    %v147 = vld [vmem:[#allocation2 + $0x8] sm:$0xff]
    %v148 = vld [vmem:[%s2] sm:$0x1]
    %v150 = vlaneseq
    %v151 = vshrl.u32 %v150, 7
    %v152 = vsub.s32 0, %v151
    %v153 = vrot.slane %v148, %v152
    %v155 = vadd.f32 %v146, %v153
    %v156 = vadd.f32 %v147, %v153
    %v157 = vmax.f32 %v155, 0.0
    %v158 = vmax.f32 %v156, 0.0
    %v159 = vpack.c.bf16 %v158, %v157
    %v161 = vunpack.c.l.b16 %v159
    %v162 = vunpack.c.h.b16 %v159
    %v163 = vpack.c.b16 %v161, %v161
    %v164 = vpack.c.b16 %v162, %v162
    %167 = vst [vmem:[%s3] sm:$0xf] %v163
    %168 = vst [vmem:[%s3 + $0x4] sm:$0xf] %v164
  $region21: #{agent_forward.6} parent=0 // pred_fallthru
    _
  // Predicated region
  $region22: #{agent_forward.6} parent=0 // pred_check
    _
  $region23: #{agent_forward.6} parent=0 // pred_check_branch
    %170 = sbr.rel (0) target = $region25
  $region24: #{agent_forward.6} parent=0 // pred_region
    _
  $region25: #{agent_forward.6} parent=0 // pred_fallthru
    _
  // Predicated region
  $region26: #{agent_forward.6} parent=0 // pred_check
    _
  $region27: #{agent_forward.6} parent=0 // pred_check_branch
    %172 = sbr.rel (0) target = $region29
  $region28: #{agent_forward.6} parent=0 // pred_region
    _
  $region29: #{agent_forward.6} parent=0 // pred_fallthru
    _

// kernel: agent_forward.7
$region0: #{agent_forward.7}
  #allocation0 [shape = 'u32[]', space=smem, size = 0x4, offset = 0x4, fixed_abs, tag = 'smem constant byte address 0x4 - core index']
  #allocation1 [shape = 'u32[144,128]{1,0:T(1,128)}', space=vmem, size = 0x12000, scoped, tag = 'internal scratch']
  %s0 = inlined_call_operand.vmem [shape: bf16[1,128], index: 0, kind: input, shape index: {}]
  %s1 = inlined_call_operand.vmem [shape: bf16[128,256], index: 1, kind: input, shape index: {}]
  %s2 = inlined_call_operand.vmem [shape: f32[1,256], index: 2, kind: input, shape index: {}]
  %s3 = inlined_call_operand.vmem [shape: bf16[128,128], index: 3, kind: input, shape index: {}]
  %s4 = inlined_call_operand.vmem [shape: f32[1,128], index: 4, kind: input, shape index: {}]
  %s5 = inlined_call_operand.vmem [shape: f32[1,128], index: 5, kind: input, shape index: {}]
  %s6 = inlined_call_operand.hbm [shape: f32[1,128], index: 6, kind: output, shape index: {0}]
  %s7 = inlined_call_operand.hbm [shape: bf16[1,128], index: 7, kind: output, shape index: {1}]
  %8 = xla_tuple %s6, %s7
  %s9 = sld [smem:[#allocation0]]
  $region42: #{agent_forward.7} parent=0
    _
  %s11 = ssub.s32 1, %s9
  %s12 = scalar_select 0, %s11, %s9
  $region1: #{agent_forward.7} parent=0
    #allocation2 [shape = 'u8[512]{0}', space=vmem, size = 0x400, scoped, tag = 'output window, operand 0, single buffered']
    #allocation3 [shape = 's32[1]{0}', space=sflag, size = 0x4, scoped, tag = 'scoped memory for agent_forward.7']
    #allocation4 [shape = 'u8[512]{0}', space=vmem, size = 0x400, scoped, tag = 'output window, operand 1, single buffered']
    #allocation5 [shape = 's32[1]{0}', space=sflag, size = 0x4, scoped, tag = 'scoped memory for agent_forward.7']
    %13 = vsyncpa [#allocation3], 0
    %14 = vsyncpa [#allocation5], 0
    // Predicated region
    $region2: #{agent_forward.7} parent=1 // pred_check
      _
    $region3: #{agent_forward.7} parent=1 // pred_check_branch
      %16 = sbr.rel (0) target = $region5
    $region4: #{agent_forward.7} parent=1 // pred_region
      _
    $region5: #{agent_forward.7} parent=1 // pred_fallthru
      _
    // Predicated region
    $region6: #{agent_forward.7} parent=1 // pred_check
      _
    $region7: #{agent_forward.7} parent=1 // pred_check_branch
      %18 = sbr.rel (0) target = $region9
    $region8: #{agent_forward.7} parent=1 // pred_region
      _
    $region9: #{agent_forward.7} parent=1 // pred_fallthru
      _
    // Predicated region
    $region10: #{agent_forward.7} parent=1 // pred_check
      _
    $region11: #{agent_forward.7} parent=1 // pred_check_branch
      %20 = sbr.rel (0) target = $region13
    $region12: #{agent_forward.7} parent=1 // pred_region
      _
    $region13: #{agent_forward.7} parent=1 // pred_fallthru
      _
    // Predicated region
    $region14: #{agent_forward.7} parent=1 // pred_check
      _
    $region15: #{agent_forward.7} parent=1 // pred_check_branch
      %22 = sbr.rel (0) target = $region17
    $region16: #{agent_forward.7} parent=1 // pred_region
      _
    $region17: #{agent_forward.7} parent=1 // pred_fallthru
      _
    // Predicated region
    $region18: #{agent_forward.7} parent=1 // pred_check
      _
    $region19: #{agent_forward.7} parent=1 // pred_check_branch
      %24 = sbr.rel (0) target = $region21
    $region20: #{agent_forward.7} parent=1 // pred_region
      _
    $region21: #{agent_forward.7} parent=1 // pred_fallthru
      _
    // Predicated region
    $region22: #{agent_forward.7} parent=1 // pred_check
      _
    $region23: #{agent_forward.7} parent=1 // pred_check_branch
      %26 = sbr.rel (0) target = $region25
    $region24: #{agent_forward.7} parent=1 // pred_region
      _
    $region25: #{agent_forward.7} parent=1 // pred_fallthru
      _
    %v28 = vld [vmem:[%s0] sm:$0x1]
    %v29 = vld [vmem:[%s1] sm:$0xff]
    %v30 = vld [vmem:[%s1 + $0x8] sm:$0xff]
    %v31 = vld [vmem:[%s1 + $0x10] sm:$0xff]
    %v32 = vld [vmem:[%s1 + $0x18] sm:$0xff]
    %v33 = vld [vmem:[%s1 + $0x20] sm:$0xff]
    %v34 = vld [vmem:[%s1 + $0x28] sm:$0xff]
    %v35 = vld [vmem:[%s1 + $0x30] sm:$0xff]
    %v36 = vld [vmem:[%s1 + $0x38] sm:$0xff]
    %v37 = vld [vmem:[%s1 + $0x40] sm:$0xff]
    %v38 = vld [vmem:[%s1 + $0x48] sm:$0xff]
    %v39 = vld [vmem:[%s1 + $0x50] sm:$0xff]
    %v40 = vld [vmem:[%s1 + $0x58] sm:$0xff]
    %v41 = vld [vmem:[%s1 + $0x60] sm:$0xff]
    %v42 = vld [vmem:[%s1 + $0x68] sm:$0xff]
    %v43 = vld [vmem:[%s1 + $0x70] sm:$0xff]
    %v44 = vld [vmem:[%s1 + $0x78] sm:$0xff]
    %v45 = vld [vmem:[%s2] sm:$0x3]
    %v62 = vunpack.c.l.b16 %v29
    %v63 = vunpack.c.h.b16 %v29
    %v64 = vunpack.c.l.b16 %v30
    %v65 = vunpack.c.h.b16 %v30
    %v66 = vunpack.c.l.b16 %v31
    %v67 = vunpack.c.h.b16 %v31
    %v68 = vunpack.c.l.b16 %v32
    %v69 = vunpack.c.h.b16 %v32
    %v70 = vunpack.c.l.b16 %v33
    %v71 = vunpack.c.h.b16 %v33
    %v72 = vunpack.c.l.b16 %v34
    %v73 = vunpack.c.h.b16 %v34
    %v74 = vunpack.c.l.b16 %v35
    %v75 = vunpack.c.h.b16 %v35
    %v76 = vunpack.c.l.b16 %v36
    %v77 = vunpack.c.h.b16 %v36
    %v78 = vunpack.c.l.b16 %v37
    %v79 = vunpack.c.h.b16 %v37
    %v80 = vunpack.c.l.b16 %v38
    %v81 = vunpack.c.h.b16 %v38
    %v82 = vunpack.c.l.b16 %v39
    %v83 = vunpack.c.h.b16 %v39
    %v84 = vunpack.c.l.b16 %v40
    %v85 = vunpack.c.h.b16 %v40
    %v86 = vunpack.c.l.b16 %v41
    %v87 = vunpack.c.h.b16 %v41
    %v88 = vunpack.c.l.b16 %v42
    %v89 = vunpack.c.h.b16 %v42
    %v90 = vunpack.c.l.b16 %v43
    %v91 = vunpack.c.h.b16 %v43
    %v92 = vunpack.c.l.b16 %v44
    %v93 = vunpack.c.h.b16 %v44
    %v94 = vpack.c.b16 %v64, %v62
    %v95 = vpack.c.b16 %v65, %v63
    %v96 = vpack.c.b16 %v68, %v66
    %v97 = vpack.c.b16 %v69, %v67
    %v98 = vpack.c.b16 %v72, %v70
    %v99 = vpack.c.b16 %v73, %v71
    %v100 = vpack.c.b16 %v76, %v74
    %v101 = vpack.c.b16 %v77, %v75
    %v102 = vpack.c.b16 %v80, %v78
    %v103 = vpack.c.b16 %v81, %v79
    %v104 = vpack.c.b16 %v84, %v82
    %v105 = vpack.c.b16 %v85, %v83
    %v106 = vpack.c.b16 %v88, %v86
    %v107 = vpack.c.b16 %v89, %v87
    %v108 = vpack.c.b16 %v92, %v90
    %v109 = vpack.c.b16 %v93, %v91
    %v127 = vlaneseq
    %v128 = vshrl.u32 %v127, 7
    %v129 = vsub.s32 0, %v128
    %v130 = vrot.slane %v45, %v129
    %v131 = vlaneseq
    %v132 = vshrl.u32 %v131, 7
    %v133 = vsub.s32 1, %v132
    %v134 = vrot.slane %v45, %v133
    %137 = vmatprep.subr.bf16.mxu0 %v95
    %138 = vmatpush1.bf16.msra.mxu0 %v94
    %139 = vmatprep.subr.bf16.mxu0 %v97
    %140 = vmatpush1.bf16.msra.mxu0 %v96
    %141 = vmatprep.subr.bf16.mxu0 %v99
    %142 = vmatpush1.bf16.msra.mxu0 %v98
    %143 = vmatprep.subr.bf16.mxu0 %v101
    %144 = vmatpush1.bf16.msra.mxu0 %v100
    %145 = vmatprep.subr.bf16.mxu0 %v103
    %146 = vmatpush1.bf16.msra.mxu0 %v102
    %147 = vmatprep.subr.bf16.mxu0 %v105
    %148 = vmatpush1.bf16.msra.mxu0 %v104
    %149 = vmatprep.subr.bf16.mxu0 %v107
    %150 = vmatpush1.bf16.msra.mxu0 %v106
    %151 = vmatprep.subr.bf16.mxu0 %v109
    %152 = vmatpush1.bf16.msra.mxu0 %v108
    %153 = vmatprep.subr.bf16.mxu0 0
    %154 = vmatpush1.bf16.msra.mxu0 0
    %155 = vmatprep.subr.bf16.mxu0 0
    %156 = vmatpush1.bf16.msra.mxu0 0
    %157 = vmatprep.subr.bf16.mxu0 0
    %158 = vmatpush1.bf16.msra.mxu0 0
    %159 = vmatprep.subr.bf16.mxu0 0
    %160 = vmatpush1.bf16.msra.mxu0 0
    %161 = vmatprep.subr.bf16.mxu0 0
    %162 = vmatpush1.bf16.msra.mxu0 0
    %163 = vmatprep.subr.bf16.mxu0 0
    %164 = vmatpush1.bf16.msra.mxu0 0
    %165 = vmatprep.subr.bf16.mxu0 0
    %166 = vmatpush1.bf16.msra.mxu0 0
    %167 = vmatprep.subr.bf16.mxu0 0
    %168 = vmatpush1.bf16.msra.mxu0 0
    %169 = vmatprep.mubr.bf16.mxu0 0
    %170 = vmatmul.mubr.bf16.gmra.mrb[0].mxu0 %v28
    %v171 = vpop.f32.mrb[0].mxu0
    %v172 = vadd.f32 %v130, %v171
    %v173 = vpop.f32.mrb[0].mxu0
    %v174 = vadd.f32 %v134, %v173
    %v175 = vpop.f32.mrb[0].mxu0
    %v176 = vpop.f32.mrb[0].mxu0
    %177 = vdwg.mxu0
    %v178 = vmul.f32 %v174, 0.5
    %v179 = vmul.f32 %v178, 1.442695
    %v180 = vpow.pop %v179
    %v181 = vld [vmem:[%s5] sm:$0x1]
    %v182 = vmul.f32 %v180, %v181
    %v183 = vadd.f32 %v172, %v182
    %184 = vst [vmem:[#allocation2] sm:$0x1] %v183
    %v185 = vpack.c.bf16 %v183, %v183
    %v186 = vld [vmem:[%s3] sm:$0xf]
    %v187 = vld [vmem:[%s3 + $0x4] sm:$0xf]
    %v188 = vld [vmem:[%s3 + $0x8] sm:$0xf]
    %v189 = vld [vmem:[%s3 + $0xc] sm:$0xf]
    %v190 = vld [vmem:[%s3 + $0x10] sm:$0xf]
    %v191 = vld [vmem:[%s3 + $0x14] sm:$0xf]
    %v192 = vld [vmem:[%s3 + $0x18] sm:$0xf]
    %v193 = vld [vmem:[%s3 + $0x1c] sm:$0xf]
    %v194 = vld [vmem:[%s3 + $0x20] sm:$0xf]
    %v195 = vld [vmem:[%s3 + $0x24] sm:$0xf]
    %v196 = vld [vmem:[%s3 + $0x28] sm:$0xf]
    %v197 = vld [vmem:[%s3 + $0x2c] sm:$0xf]
    %v198 = vld [vmem:[%s3 + $0x30] sm:$0xf]
    %v199 = vld [vmem:[%s3 + $0x34] sm:$0xf]
    %v200 = vld [vmem:[%s3 + $0x38] sm:$0xf]
    %v201 = vld [vmem:[%s3 + $0x3c] sm:$0xf]
    %v202 = vld [vmem:[%s4] sm:$0x1]
    %v219 = vunpack.c.l.b16 %v186
    %v220 = vunpack.c.l.b16 %v187
    %v221 = vunpack.c.l.b16 %v188
    %v222 = vunpack.c.l.b16 %v189
    %v223 = vunpack.c.l.b16 %v190
    %v224 = vunpack.c.l.b16 %v191
    %v225 = vunpack.c.l.b16 %v192
    %v226 = vunpack.c.l.b16 %v193
    %v227 = vunpack.c.l.b16 %v194
    %v228 = vunpack.c.l.b16 %v195
    %v229 = vunpack.c.l.b16 %v196
    %v230 = vunpack.c.l.b16 %v197
    %v231 = vunpack.c.l.b16 %v198
    %v232 = vunpack.c.l.b16 %v199
    %v233 = vunpack.c.l.b16 %v200
    %v234 = vunpack.c.l.b16 %v201
    %v235 = vpack.c.b16 %v220, %v219
    %v236 = vpack.c.b16 %v222, %v221
    %v237 = vpack.c.b16 %v224, %v223
    %v238 = vpack.c.b16 %v226, %v225
    %v239 = vpack.c.b16 %v228, %v227
    %v240 = vpack.c.b16 %v230, %v229
    %v241 = vpack.c.b16 %v232, %v231
    %v242 = vpack.c.b16 %v234, %v233
    %251 = vmatprep.subr.bf16.mxu0 0
    %252 = vmatpush1.bf16.msra.mxu0 %v235
    %253 = vmatprep.subr.bf16.mxu0 0
    %254 = vmatpush1.bf16.msra.mxu0 %v236
    %255 = vmatprep.subr.bf16.mxu0 0
    %256 = vmatpush1.bf16.msra.mxu0 %v237
    %257 = vmatprep.subr.bf16.mxu0 0
    %258 = vmatpush1.bf16.msra.mxu0 %v238
    %259 = vmatprep.subr.bf16.mxu0 0
    %260 = vmatpush1.bf16.msra.mxu0 %v239
    %261 = vmatprep.subr.bf16.mxu0 0
    %262 = vmatpush1.bf16.msra.mxu0 %v240
    %263 = vmatprep.subr.bf16.mxu0 0
    %264 = vmatpush1.bf16.msra.mxu0 %v241
    %265 = vmatprep.subr.bf16.mxu0 0
    %266 = vmatpush1.bf16.msra.mxu0 %v242
    %267 = vmatprep.subr.bf16.mxu0 0
    %268 = vmatpush1.bf16.msra.mxu0 0
    %269 = vmatprep.subr.bf16.mxu0 0
    %270 = vmatpush1.bf16.msra.mxu0 0
    %271 = vmatprep.subr.bf16.mxu0 0
    %272 = vmatpush1.bf16.msra.mxu0 0
    %273 = vmatprep.subr.bf16.mxu0 0
    %274 = vmatpush1.bf16.msra.mxu0 0
    %275 = vmatprep.subr.bf16.mxu0 0
    %276 = vmatpush1.bf16.msra.mxu0 0
    %277 = vmatprep.subr.bf16.mxu0 0
    %278 = vmatpush1.bf16.msra.mxu0 0
    %279 = vmatprep.subr.bf16.mxu0 0
    %280 = vmatpush1.bf16.msra.mxu0 0
    %281 = vmatprep.subr.bf16.mxu0 0
    %282 = vmatpush1.bf16.msra.mxu0 0
    %283 = vmatprep.mubr.bf16.mxu0 0
    %284 = vmatmul.mubr.bf16.gmra.mrb[0].mxu0 %v185
    %v285 = vpop.f32.mrb[0].mxu0
    %v286 = vadd.f32 %v202, %v285
    %v287 = vpop.f32.mrb[0].mxu0
    %v288 = vpop.f32.mrb[0].mxu0
    %v289 = vpop.f32.mrb[0].mxu0
    %290 = vdwg.mxu0
    %v291 = vmax.f32 %v286, 0.0
    %v292 = vpack.c.bf16 %v291, %v291
    %vm293 = vcmask 1040384
    %vm294 = vsmask.f32 256
    %vm295 = vmand %vm293, %vm294
    %v296 = vld [vmem:[#allocation4] sm:$0x1]
    %v297 = vsel %vm295, %v292, %v296
    %298 = vst [vmem:[#allocation4] sm:$0x1] %v297
    // Predicated region
    $region26: #{agent_forward.7} parent=1 // pred_check
      _
    $region27: #{agent_forward.7} parent=1 // pred_check_branch
      %300 = sbr.rel (0) target = $region29
    $region28: #{agent_forward.7} parent=1 // pred_region
      %s302 = ssub.s32 16, 16
      %303 = vsyncadd [#allocation3], %s302
      %s305 = sshll.u32 [#allocation2], 4
      %s306 = int_to_ptr.vmem [resolvable:$true] %s305
      %308 = dma.vmem_to_hbm [thread:$0]  %s306, 16, %s6, [#allocation3]
    $region29: #{agent_forward.7} parent=1 // pred_fallthru
      _
    // Predicated region
    $region30: #{agent_forward.7} parent=1 // pred_check
      _
    $region31: #{agent_forward.7} parent=1 // pred_check_branch
      %310 = sbr.rel (0) target = $region33
    $region32: #{agent_forward.7} parent=1 // pred_region
      %s312 = ssub.s32 16, 16
      %313 = vsyncadd [#allocation5], %s312
      %s315 = sshll.u32 [#allocation4], 4
      %s316 = int_to_ptr.vmem [resolvable:$true] %s315
      %318 = dma.vmem_to_hbm [thread:$0]  %s316, 16, %s7, [#allocation5]
    $region33: #{agent_forward.7} parent=1 // pred_fallthru
      _
    // Predicated region
    $region34: #{agent_forward.7} parent=1 // pred_check
      _
    $region35: #{agent_forward.7} parent=1 // pred_check_branch
      %320 = sbr.rel (0) target = $region37
    $region36: #{agent_forward.7} parent=1 // pred_region
      %321 = dma.done [#allocation3], 16
    $region37: #{agent_forward.7} parent=1 // pred_fallthru
      _
    // Predicated region
    $region38: #{agent_forward.7} parent=1 // pred_check
      _
    $region39: #{agent_forward.7} parent=1 // pred_check_branch
      %323 = sbr.rel (0) target = $region41
    $region40: #{agent_forward.7} parent=1 // pred_region
      %324 = dma.done [#allocation5], 16
    $region41: #{agent_forward.7} parent=1 // pred_fallthru
      _
    %325 = vsyncpa [#allocation3], 1
    %326 = vsyncpa [#allocation5], 1

</llo_original>
